<compile_context>
chip_gen: v6e
topology: v6e:2x2x1
jax: 0.10.0
libtpu: 0.0.40
codegen_flags: <defaults>
</compile_context>

<pallas_src>
import functools

import jax
import jax.numpy as jnp
from jax.experimental import pallas as pl
from jax.experimental.pallas import tpu as pltpu

DIMS = (28 * 28, 256, 128, 64, 128, 256, 28 * 28)


def _round_up(x, m):
    return ((x + m - 1) // m) * m


def ae_kernel(x_ref,
              w1_ref, b1_ref, w2_ref, b2_ref, w3_ref, b3_ref,
              w4_ref, b4_ref, w5_ref, b5_ref, w6_ref, b6_ref,
              o_ref):
    """Fused 6-layer MLP autoencoder for one batch tile."""

    def dense(h_bf16, w_ref, b_ref):
        # bf16 x bf16 -> f32 accumulation on the MXU, f32 bias broadcast.
        acc = jnp.dot(h_bf16, w_ref[...], preferred_element_type=jnp.float32)
        return acc + b_ref[...]

    # x arrives f32 straight from HBM; cast to bf16 in-kernel (no wrapper-side
    # bf16 copy of x in HBM).
    h = x_ref[...].astype(jnp.bfloat16)                                  # [TILE_B, 784]
    h = jnp.maximum(dense(h, w1_ref, b1_ref), 0.0).astype(jnp.bfloat16)  # linear1 + ReLU
    h = jnp.maximum(dense(h, w2_ref, b2_ref), 0.0).astype(jnp.bfloat16)  # linear2 + ReLU
    h = jnp.maximum(dense(h, w3_ref, b3_ref), 0.0).astype(jnp.bfloat16)  # linear3 + ReLU
    h = jnp.maximum(dense(h, w4_ref, b4_ref), 0.0).astype(jnp.bfloat16)  # linear4 + ReLU
    h = jnp.maximum(dense(h, w5_ref, b5_ref), 0.0).astype(jnp.bfloat16)  # linear5 + ReLU
    z = dense(h, w6_ref, b6_ref)                                         # linear6 (f32)

    # Numerically stable sigmoid: exp(-|z|) never overflows; exp + reciprocal
    # both run in the EUP slot instead of burning VPU cycles.
    e = jnp.exp(-jnp.abs(z))
    sig_pos = pl.reciprocal(1.0 + e, approx=True)                        # sigmoid(|z|)
    o_ref[...] = jnp.where(z >= 0.0, sig_pos, 1.0 - sig_pos).astype(o_ref.dtype)


def prepare_params(params):
    """Cast ONCE outside the jitted forward: bf16 weights (MXU operands),
    f32 biases (f32 elementwise path). Reuse the returned tuple across calls."""
    flat = []
    for w, b in params:
        flat.append(jnp.asarray(w, jnp.bfloat16))
        flat.append(jnp.asarray(b, jnp.float32).reshape(1, -1))
    return tuple(flat)


def _choose_tile_b(B, tile_b):
    """Batch tile: multiple of 16, as large as requested, but never a
    single-tile grid for B >= 512 (keeps both v7x TensorCores busy)."""
    tb = _round_up(min(tile_b, B), 16)
    if B >= 512 and pl.cdiv(B, tb) < 2:
        tb = _round_up(pl.cdiv(B, 2), 16)
    return tb


@functools.partial(jax.jit, static_argnames=("tile_b", "out_dtype"))
def denoising_ae_forward(x, flat_params, tile_b=1024, out_dtype=jnp.float32):
    """x: [B, 784] float32; flat_params: output of prepare_params (12 arrays)."""
    B, F = x.shape
    assert F == DIMS[0]

    tb = _choose_tile_b(B, tile_b)
    # No jnp.pad: Pallas masks the partial last tile. Compute is row-wise
    # independent, so padded (garbage) rows never affect valid output rows
    # and their stores are dropped.
    grid = (pl.cdiv(B, tb),)

    x_spec = pl.BlockSpec((tb, DIMS[0]), lambda i: (i, 0))
    o_spec = pl.BlockSpec((tb, DIMS[-1]), lambda i: (i, 0))
    # Full-array blocks with a constant block index -> weights/biases stay
    # VMEM-resident across the whole batch grid (DMA'd once).
    wb_specs = [pl.BlockSpec(a.shape, lambda i: (0, 0)) for a in flat_params]

    flops = 2 * B * sum(DIMS[i] * DIMS[i + 1] for i in range(6))
    bytes_accessed = (x.size * x.dtype.itemsize                       # f32 input
                      + B * DIMS[-1] * jnp.dtype(out_dtype).itemsize  # output
                      + sum(a.size * a.dtype.itemsize for a in flat_params))
    cost = pl.CostEstimate(flops=flops,
                           transcendentals=2 * B * DIMS[-1],          # exp + reciprocal
                           bytes_accessed=bytes_accessed)

    out = pl.pallas_call(
        ae_kernel,
        out_shape=jax.ShapeDtypeStruct((B, DIMS[-1]), out_dtype),
        grid_spec=pltpu.PrefetchScalarGridSpec(
            num_scalar_prefetch=0,
            grid=grid,
            in_specs=[x_spec] + wb_specs,
            out_specs=o_spec),
        compiler_params=pltpu.CompilerParams(
            dimension_semantics=("parallel",),
            vmem_limit_bytes=48 * 1024 * 1024),
        cost_estimate=cost,
    )(x, *flat_params)

    return out


def init_params(key):
    """Deterministic init mimicking nn.Linear's default U(-1/sqrt(fan_in), +)."""
    params = []
    for i in range(6):
        fan_in, fan_out = DIMS[i], DIMS[i + 1]
        key, kw, kb = jax.random.split(key, 3)
        bound = 1.0 / jnp.sqrt(jnp.float32(fan_in))
        w = jax.random.uniform(kw, (fan_in, fan_out), jnp.float32, -bound, bound)
        b = jax.random.uniform(kb, (1, fan_out), jnp.float32, -bound, bound)
        params.append((w, b))
    return params


def reference_forward_f32(x, params):
    """Pure-f32 reference matching the original PyTorch module."""
    h = x
    for i, (w, b) in enumerate(params):
        h = h @ w + b
        if i < 5:
            h = jnp.maximum(h, 0.0)
    return jax.nn.sigmoid(h)


def reference_forward_bf16(x, params):
    """Reference mirroring the kernel numerics (bf16 matmul operands, f32 accum)."""
    h = x.astype(jnp.bfloat16)
    for i, (w, b) in enumerate(params):
        h = jax.lax.dot(h, w.astype(jnp.bfloat16),
                        preferred_element_type=jnp.float32) + b
        if i < 5:
            h = jnp.maximum(h, 0.0).astype(jnp.bfloat16)
    return jax.nn.sigmoid(h)


if __name__ == "__main__":
    key = jax.random.PRNGKey(0)
    kx, kp = jax.random.split(key)

    # Small test batch, deliberately NOT a multiple of the tile so the
    # partial-tile (masked last block) path is exercised: grid = cdiv(48,32)=2.
    B = 48
    x = jax.random.uniform(kx, (B, 28 * 28), dtype=jnp.float32)
    params = init_params(kp)
    flat = prepare_params(params)          # one-time bf16/f32 cast, outside jit

    out = denoising_ae_forward(x, flat, tile_b=32)
    jax.block_until_ready(out)

    assert out.shape == (B, 28 * 28)
    ref_bf16 = reference_forward_bf16(x, params)
    ref_f32 = reference_forward_f32(x, params)
    assert jnp.allclose(out, ref_bf16, rtol=2e-2, atol=2e-3), \
        "mismatch vs bf16-matmul reference"
    assert jnp.allclose(out, ref_f32, rtol=5e-2, atol=5e-2), \
        "mismatch vs fp32 reference"

    print("KERNEL_OK")
</pallas_src>

<mosaic_0001>
module attributes {stable_mosaic.version = 11 : i64} {
  func.func @ae_kernel(%arg0: i32, %arg1: memref<32x784xf32, #tpu.memory_space<vmem>>, %arg2: memref<784x256xbf16, #tpu.memory_space<vmem>>, %arg3: memref<1x256xf32, #tpu.memory_space<vmem>>, %arg4: memref<256x128xbf16, #tpu.memory_space<vmem>>, %arg5: memref<1x128xf32, #tpu.memory_space<vmem>>, %arg6: memref<128x64xbf16, #tpu.memory_space<vmem>>, %arg7: memref<1x64xf32, #tpu.memory_space<vmem>>, %arg8: memref<64x128xbf16, #tpu.memory_space<vmem>>, %arg9: memref<1x128xf32, #tpu.memory_space<vmem>>, %arg10: memref<128x256xbf16, #tpu.memory_space<vmem>>, %arg11: memref<1x256xf32, #tpu.memory_space<vmem>>, %arg12: memref<256x784xbf16, #tpu.memory_space<vmem>>, %arg13: memref<1x784xf32, #tpu.memory_space<vmem>>, %arg14: memref<32x784xf32, #tpu.memory_space<vmem>>) attributes {dimension_semantics = [#tpu.dimension_semantics<parallel>], iteration_bounds = array<i64: 2>, scalar_prefetch = 0 : i64, scratch_operands = 0 : i64, tpu.core_type = #tpu.core_type<tc>, window_params = [{transform_indices = @transform_0, window_bounds = array<i64: 32, 784>}, {pipeline_mode = #tpu.pipeline_mode<synchronous>, transform_indices = @transform_1, window_bounds = array<i64: 784, 256>}, {pipeline_mode = #tpu.pipeline_mode<synchronous>, transform_indices = @transform_2, window_bounds = array<i64: 1, 256>}, {pipeline_mode = #tpu.pipeline_mode<synchronous>, transform_indices = @transform_3, window_bounds = array<i64: 256, 128>}, {pipeline_mode = #tpu.pipeline_mode<synchronous>, transform_indices = @transform_4, window_bounds = array<i64: 1, 128>}, {pipeline_mode = #tpu.pipeline_mode<synchronous>, transform_indices = @transform_5, window_bounds = array<i64: 128, 64>}, {pipeline_mode = #tpu.pipeline_mode<synchronous>, transform_indices = @transform_6, window_bounds = array<i64: 1, 64>}, {pipeline_mode = #tpu.pipeline_mode<synchronous>, transform_indices = @transform_7, window_bounds = array<i64: 64, 128>}, {pipeline_mode = #tpu.pipeline_mode<synchronous>, transform_indices = @transform_8, window_bounds = array<i64: 1, 128>}, {pipeline_mode = #tpu.pipeline_mode<synchronous>, transform_indices = @transform_9, window_bounds = array<i64: 128, 256>}, {pipeline_mode = #tpu.pipeline_mode<synchronous>, transform_indices = @transform_10, window_bounds = array<i64: 1, 256>}, {pipeline_mode = #tpu.pipeline_mode<synchronous>, transform_indices = @transform_11, window_bounds = array<i64: 256, 784>}, {pipeline_mode = #tpu.pipeline_mode<synchronous>, transform_indices = @transform_12, window_bounds = array<i64: 1, 784>}, {transform_indices = @transform_13, window_bounds = array<i64: 32, 784>}]} {
    %c0 = arith.constant 0 : index
    %c0_0 = arith.constant 0 : index
    %0 = vector.load %arg1[%c0, %c0_0] : memref<32x784xf32, #tpu.memory_space<vmem>>, vector<32x784xf32>
    %1 = arith.truncf %0 : vector<32x784xf32> to vector<32x784xbf16>
    %c0_1 = arith.constant 0 : index
    %c0_2 = arith.constant 0 : index
    %2 = vector.load %arg2[%c0_1, %c0_2] : memref<784x256xbf16, #tpu.memory_space<vmem>>, vector<784x256xbf16>
    %cst = arith.constant dense<0.000000e+00> : vector<32x256xf32>
    %3 = tpu.matmul %1, %2, %cst {dimension_numbers = #tpu.dot_dimension_numbers<[1], [0], [0], [1], [0, 0, 1, 1], [], []>} : vector<32x784xbf16>, vector<784x256xbf16>, vector<32x256xf32> -> vector<32x256xf32>
    %c0_3 = arith.constant 0 : index
    %c0_4 = arith.constant 0 : index
    %4 = vector.load %arg3[%c0_3, %c0_4] : memref<1x256xf32, #tpu.memory_space<vmem>>, vector<1x256xf32>
    %5 = vector.broadcast %4 : vector<1x256xf32> to vector<32x256xf32>
    %6 = arith.addf %3, %5 : vector<32x256xf32>
    %cst_5 = arith.constant 0.000000e+00 : f32
    %7 = vector.broadcast %cst_5 : f32 to vector<32x256xf32>
    %8 = arith.maximumf %6, %7 : vector<32x256xf32>
    %9 = arith.truncf %8 : vector<32x256xf32> to vector<32x256xbf16>
    %c0_6 = arith.constant 0 : index
    %c0_7 = arith.constant 0 : index
    %10 = vector.load %arg4[%c0_6, %c0_7] : memref<256x128xbf16, #tpu.memory_space<vmem>>, vector<256x128xbf16>
    %cst_8 = arith.constant dense<0.000000e+00> : vector<32x128xf32>
    %11 = tpu.matmul %9, %10, %cst_8 {dimension_numbers = #tpu.dot_dimension_numbers<[1], [0], [0], [1], [0, 0, 1, 1], [], []>} : vector<32x256xbf16>, vector<256x128xbf16>, vector<32x128xf32> -> vector<32x128xf32>
    %c0_9 = arith.constant 0 : index
    %c0_10 = arith.constant 0 : index
    %12 = vector.load %arg5[%c0_9, %c0_10] : memref<1x128xf32, #tpu.memory_space<vmem>>, vector<1x128xf32>
    %13 = vector.broadcast %12 : vector<1x128xf32> to vector<32x128xf32>
    %14 = arith.addf %11, %13 : vector<32x128xf32>
    %cst_11 = arith.constant 0.000000e+00 : f32
    %15 = vector.broadcast %cst_11 : f32 to vector<32x128xf32>
    %16 = arith.maximumf %14, %15 : vector<32x128xf32>
    %17 = arith.truncf %16 : vector<32x128xf32> to vector<32x128xbf16>
    %c0_12 = arith.constant 0 : index
    %c0_13 = arith.constant 0 : index
    %18 = vector.load %arg6[%c0_12, %c0_13] : memref<128x64xbf16, #tpu.memory_space<vmem>>, vector<128x64xbf16>
    %cst_14 = arith.constant dense<0.000000e+00> : vector<32x64xf32>
    %19 = tpu.matmul %17, %18, %cst_14 {dimension_numbers = #tpu.dot_dimension_numbers<[1], [0], [0], [1], [0, 0, 1, 1], [], []>} : vector<32x128xbf16>, vector<128x64xbf16>, vector<32x64xf32> -> vector<32x64xf32>
    %c0_15 = arith.constant 0 : index
    %c0_16 = arith.constant 0 : index
    %20 = vector.load %arg7[%c0_15, %c0_16] : memref<1x64xf32, #tpu.memory_space<vmem>>, vector<1x64xf32>
    %21 = vector.broadcast %20 : vector<1x64xf32> to vector<32x64xf32>
    %22 = arith.addf %19, %21 : vector<32x64xf32>
    %cst_17 = arith.constant 0.000000e+00 : f32
    %23 = vector.broadcast %cst_17 : f32 to vector<32x64xf32>
    %24 = arith.maximumf %22, %23 : vector<32x64xf32>
    %25 = arith.truncf %24 : vector<32x64xf32> to vector<32x64xbf16>
    %c0_18 = arith.constant 0 : index
    %c0_19 = arith.constant 0 : index
    %26 = vector.load %arg8[%c0_18, %c0_19] : memref<64x128xbf16, #tpu.memory_space<vmem>>, vector<64x128xbf16>
    %cst_20 = arith.constant dense<0.000000e+00> : vector<32x128xf32>
    %27 = tpu.matmul %25, %26, %cst_20 {dimension_numbers = #tpu.dot_dimension_numbers<[1], [0], [0], [1], [0, 0, 1, 1], [], []>} : vector<32x64xbf16>, vector<64x128xbf16>, vector<32x128xf32> -> vector<32x128xf32>
    %c0_21 = arith.constant 0 : index
    %c0_22 = arith.constant 0 : index
    %28 = vector.load %arg9[%c0_21, %c0_22] : memref<1x128xf32, #tpu.memory_space<vmem>>, vector<1x128xf32>
    %29 = vector.broadcast %28 : vector<1x128xf32> to vector<32x128xf32>
    %30 = arith.addf %27, %29 : vector<32x128xf32>
    %cst_23 = arith.constant 0.000000e+00 : f32
    %31 = vector.broadcast %cst_23 : f32 to vector<32x128xf32>
    %32 = arith.maximumf %30, %31 : vector<32x128xf32>
    %33 = arith.truncf %32 : vector<32x128xf32> to vector<32x128xbf16>
    %c0_24 = arith.constant 0 : index
    %c0_25 = arith.constant 0 : index
    %34 = vector.load %arg10[%c0_24, %c0_25] : memref<128x256xbf16, #tpu.memory_space<vmem>>, vector<128x256xbf16>
    %cst_26 = arith.constant dense<0.000000e+00> : vector<32x256xf32>
    %35 = tpu.matmul %33, %34, %cst_26 {dimension_numbers = #tpu.dot_dimension_numbers<[1], [0], [0], [1], [0, 0, 1, 1], [], []>} : vector<32x128xbf16>, vector<128x256xbf16>, vector<32x256xf32> -> vector<32x256xf32>
    %c0_27 = arith.constant 0 : index
    %c0_28 = arith.constant 0 : index
    %36 = vector.load %arg11[%c0_27, %c0_28] : memref<1x256xf32, #tpu.memory_space<vmem>>, vector<1x256xf32>
    %37 = vector.broadcast %36 : vector<1x256xf32> to vector<32x256xf32>
    %38 = arith.addf %35, %37 : vector<32x256xf32>
    %cst_29 = arith.constant 0.000000e+00 : f32
    %39 = vector.broadcast %cst_29 : f32 to vector<32x256xf32>
    %40 = arith.maximumf %38, %39 : vector<32x256xf32>
    %41 = arith.truncf %40 : vector<32x256xf32> to vector<32x256xbf16>
    %c0_30 = arith.constant 0 : index
    %c0_31 = arith.constant 0 : index
    %42 = vector.load %arg12[%c0_30, %c0_31] : memref<256x784xbf16, #tpu.memory_space<vmem>>, vector<256x784xbf16>
    %cst_32 = arith.constant dense<0.000000e+00> : vector<32x784xf32>
    %43 = tpu.matmul %41, %42, %cst_32 {dimension_numbers = #tpu.dot_dimension_numbers<[1], [0], [0], [1], [0, 0, 1, 1], [], []>} : vector<32x256xbf16>, vector<256x784xbf16>, vector<32x784xf32> -> vector<32x784xf32>
    %c0_33 = arith.constant 0 : index
    %c0_34 = arith.constant 0 : index
    %44 = vector.load %arg13[%c0_33, %c0_34] : memref<1x784xf32, #tpu.memory_space<vmem>>, vector<1x784xf32>
    %45 = vector.broadcast %44 : vector<1x784xf32> to vector<32x784xf32>
    %46 = arith.addf %43, %45 : vector<32x784xf32>
    %47 = math.absf %46 : vector<32x784xf32>
    %cst_35 = arith.constant 0.000000e+00 : f32
    %48 = vector.broadcast %cst_35 : f32 to vector<32x784xf32>
    %49 = arith.subf %48, %47 : vector<32x784xf32>
    %50 = math.exp %49 : vector<32x784xf32>
    %cst_36 = arith.constant 1.000000e+00 : f32
    %51 = vector.broadcast %cst_36 : f32 to vector<32x784xf32>
    %52 = arith.addf %51, %50 : vector<32x784xf32>
    %53 = tpu.reciprocal %52 {approx = true} : vector<32x784xf32> -> vector<32x784xf32>
    %cst_37 = arith.constant 0.000000e+00 : f32
    %54 = vector.broadcast %cst_37 : f32 to vector<32x784xf32>
    %55 = arith.cmpf oge, %46, %54 : vector<32x784xf32>
    %cst_38 = arith.constant 1.000000e+00 : f32
    %56 = vector.broadcast %cst_38 : f32 to vector<32x784xf32>
    %57 = arith.subf %56, %53 : vector<32x784xf32>
    %58 = arith.select %55, %53, %57 : vector<32x784xi1>, vector<32x784xf32>
    %c0_39 = arith.constant 0 : index
    %c0_40 = arith.constant 0 : index
    %59 = vector.load %arg14[%c0_39, %c0_40] : memref<32x784xf32, #tpu.memory_space<vmem>>, vector<32x784xf32>
    tpu.vector_store %arg14[%c0_39, %c0_40], %58 {strides = array<i32>} : memref<32x784xf32, #tpu.memory_space<vmem>>, vector<32x784xf32>,
    return
  }
  func.func @transform_0(%arg0: i32) -> (i32, i32) {
    %c0_i32 = arith.constant 0 : i32
    %c0_i32_0 = arith.constant 0 : i32
    return %arg0, %c0_i32 : i32, i32
  }
  func.func @transform_1(%arg0: i32) -> (i32, i32) {
    %c0_i32 = arith.constant 0 : i32
    %c0_i32_0 = arith.constant 0 : i32
    %c0_i32_1 = arith.constant 0 : i32
    return %c0_i32, %c0_i32_0 : i32, i32
  }
  func.func @transform_2(%arg0: i32) -> (i32, i32) {
    %c0_i32 = arith.constant 0 : i32
    %c0_i32_0 = arith.constant 0 : i32
    %c0_i32_1 = arith.constant 0 : i32
    return %c0_i32, %c0_i32_0 : i32, i32
  }
  func.func @transform_3(%arg0: i32) -> (i32, i32) {
    %c0_i32 = arith.constant 0 : i32
    %c0_i32_0 = arith.constant 0 : i32
    %c0_i32_1 = arith.constant 0 : i32
    return %c0_i32, %c0_i32_0 : i32, i32
  }
  func.func @transform_4(%arg0: i32) -> (i32, i32) {
    %c0_i32 = arith.constant 0 : i32
    %c0_i32_0 = arith.constant 0 : i32
    %c0_i32_1 = arith.constant 0 : i32
    return %c0_i32, %c0_i32_0 : i32, i32
  }
  func.func @transform_5(%arg0: i32) -> (i32, i32) {
    %c0_i32 = arith.constant 0 : i32
    %c0_i32_0 = arith.constant 0 : i32
    %c0_i32_1 = arith.constant 0 : i32
    return %c0_i32, %c0_i32_0 : i32, i32
  }
  func.func @transform_6(%arg0: i32) -> (i32, i32) {
    %c0_i32 = arith.constant 0 : i32
    %c0_i32_0 = arith.constant 0 : i32
    %c0_i32_1 = arith.constant 0 : i32
    return %c0_i32, %c0_i32_0 : i32, i32
  }
  func.func @transform_7(%arg0: i32) -> (i32, i32) {
    %c0_i32 = arith.constant 0 : i32
    %c0_i32_0 = arith.constant 0 : i32
    %c0_i32_1 = arith.constant 0 : i32
    return %c0_i32, %c0_i32_0 : i32, i32
  }
  func.func @transform_8(%arg0: i32) -> (i32, i32) {
    %c0_i32 = arith.constant 0 : i32
    %c0_i32_0 = arith.constant 0 : i32
    %c0_i32_1 = arith.constant 0 : i32
    return %c0_i32, %c0_i32_0 : i32, i32
  }
  func.func @transform_9(%arg0: i32) -> (i32, i32) {
    %c0_i32 = arith.constant 0 : i32
    %c0_i32_0 = arith.constant 0 : i32
    %c0_i32_1 = arith.constant 0 : i32
    return %c0_i32, %c0_i32_0 : i32, i32
  }
  func.func @transform_10(%arg0: i32) -> (i32, i32) {
    %c0_i32 = arith.constant 0 : i32
    %c0_i32_0 = arith.constant 0 : i32
    %c0_i32_1 = arith.constant 0 : i32
    return %c0_i32, %c0_i32_0 : i32, i32
  }
  func.func @transform_11(%arg0: i32) -> (i32, i32) {
    %c0_i32 = arith.constant 0 : i32
    %c0_i32_0 = arith.constant 0 : i32
    %c0_i32_1 = arith.constant 0 : i32
    return %c0_i32, %c0_i32_0 : i32, i32
  }
  func.func @transform_12(%arg0: i32) -> (i32, i32) {
    %c0_i32 = arith.constant 0 : i32
    %c0_i32_0 = arith.constant 0 : i32
    %c0_i32_1 = arith.constant 0 : i32
    return %c0_i32, %c0_i32_0 : i32, i32
  }
  func.func @transform_13(%arg0: i32) -> (i32, i32) {
    %c0_i32 = arith.constant 0 : i32
    %c0_i32_0 = arith.constant 0 : i32
    return %arg0, %c0_i32 : i32, i32
  }
}

</mosaic_0001>

<llo_original>
// kernel: denoising_ae_forward.1
$region0: #{denoising_ae_forward.1}
  #allocation0 [shape = 'u32[]', space=smem, size = 0x4, offset = 0x4, fixed_abs, tag = 'smem constant byte address 0x4 - core index']
  #allocation1 [shape = 'u32[144,128]{1,0:T(1,128)}', space=vmem, size = 0x12000, scoped, tag = 'internal scratch']
  %s0 = inlined_call_operand.vmem [shape: f32[48,784], index: 0, kind: input, shape index: {}]
  %s1 = inlined_call_operand.vmem [shape: bf16[784,256], index: 1, kind: input, shape index: {}]
  %s2 = inlined_call_operand.vmem [shape: f32[1,256], index: 2, kind: input, shape index: {}]
  %s3 = inlined_call_operand.vmem [shape: bf16[256,128], index: 3, kind: input, shape index: {}]
  %s4 = inlined_call_operand.vmem [shape: f32[1,128], index: 4, kind: input, shape index: {}]
  %s5 = inlined_call_operand.vmem [shape: bf16[128,64], index: 5, kind: input, shape index: {}]
  %s6 = inlined_call_operand.vmem [shape: f32[1,64], index: 6, kind: input, shape index: {}]
  %s7 = inlined_call_operand.vmem [shape: bf16[64,128], index: 7, kind: input, shape index: {}]
  %s8 = inlined_call_operand.vmem [shape: f32[1,128], index: 8, kind: input, shape index: {}]
  %s9 = inlined_call_operand.vmem [shape: bf16[128,256], index: 9, kind: input, shape index: {}]
  %s10 = inlined_call_operand.vmem [shape: f32[1,256], index: 10, kind: input, shape index: {}]
  %s11 = inlined_call_operand.vmem [shape: bf16[256,784], index: 11, kind: input, shape index: {}]
  %s12 = inlined_call_operand.vmem [shape: f32[1,784], index: 12, kind: input, shape index: {}]
  %s13 = inlined_call_operand.hbm [shape: f32[48,784], index: 13, kind: output, shape index: {}]
  %s14 = sld [smem:[#allocation0]]
  $region85: #{denoising_ae_forward.1} parent=0
    _
  %s16 = ssub.s32 1, %s14
  %s17 = scalar_select 0, %s16, %s14
  $region1: #{denoising_ae_forward.1} parent=0
    #allocation2 [shape = 'u8[229376]{0}', space=vmem, size = 0x38000, scoped, tag = 'output window, operand 0']
    #allocation3 [shape = 's32[2]{0}', space=sflag, size = 0x8, scoped, tag = 'scoped memory for denoising_ae_forward.1']
    %18 = vsyncpa [#allocation3], 0
    %s19 = scalar_lea.sflag [#allocation3], 1
    %20 = vsyncpa %s19, 0
    loop: start=0, step=1, limit=4
    $region2: #{denoising_ae_forward.1} parent=1 // loop_pre_header
      _
    $region3: #{denoising_ae_forward.1} parent=1 // loop_header
      %s22 = sphi 0, %s26
      %p23 = scmp.ge.s32.totalorder %s22, 4
      %s32 = sphi 0, %s34
      %s35 = sphi 0, %s32
      %s36 = sphi 0, %s35
      %s52 = sphi 0, %s36
      %s56 = sphi 0, %s56
      %s58 = sphi 0, %s56
      %s59 = sphi 0, %s58
      %s73 = sphi 0, %s59
      %s77 = sphi 0, %s77
      %s79 = sphi 0, %s77
      %s80 = sphi 0, %s79
      %s94 = sphi 0, %s80
      %s98 = sphi 0, %s98
      %s100 = sphi 0, %s98
      %s101 = sphi 0, %s100
      %s115 = sphi 0, %s101
      %s119 = sphi 0, %s119
      %s121 = sphi 0, %s119
      %s122 = sphi 0, %s121
      %s136 = sphi 0, %s122
      %s140 = sphi 0, %s140
      %s142 = sphi 0, %s140
      %s143 = sphi 0, %s142
      %s157 = sphi 0, %s143
      %s161 = sphi 0, %s161
      %s163 = sphi 0, %s161
      %s164 = sphi 0, %s163
      %s178 = sphi 0, %s164
      %s182 = sphi 0, %s182
      %s184 = sphi 0, %s182
      %s185 = sphi 0, %s184
      %s199 = sphi 0, %s185
      %s203 = sphi 0, %s203
      %s205 = sphi 0, %s203
      %s206 = sphi 0, %s205
      %s220 = sphi 0, %s206
      %s224 = sphi 0, %s224
      %s226 = sphi 0, %s224
      %s227 = sphi 0, %s226
      %s241 = sphi 0, %s227
      %s245 = sphi 0, %s245
      %s247 = sphi 0, %s245
      %s248 = sphi 0, %s247
      %s262 = sphi 0, %s248
      %s266 = sphi 0, %s266
      %s268 = sphi 0, %s266
      %s269 = sphi 0, %s268
      %s283 = sphi 0, %s269
      %s287 = sphi 0, %s287
      %s289 = sphi 0, %s287
      %s290 = sphi 0, %s289
      %s304 = sphi 0, %s290
      %s310 = sphi 0, %s312
      %s313 = sphi 0, %s310
      %s314 = sphi 0, %s313
      %s330 = sphi 0, %s314
    $region4: #{denoising_ae_forward.1} parent=1 // loop_header_branch
      %25 = sbr.rel (%p23) target = $region8
    $region5: #{denoising_ae_forward.1} parent=1 // loop_body
      %s27 = ssub.s32 %s22, 1
      %s28 = ssub.s32 %s22, 2
      %s29 = sadd.s32 %s22, 1
      %s30 = ssub.s32 %s22, %s29
      %p31 = scmp.eq.s32.totalorder %s30, 0
      %s33 = sadd.s32 %s32, 1
      %s34 = scalar_select %p31, %s32, %s33
      %p37 = pneg %p31
      %p38 = scmp.eq.s32.totalorder %s22, 1
      %p39 = por %p37, %p38
      %p40 = scmp.ne.s32.totalorder %s32, %s35
      %p41 = scmp.eq.s32.totalorder %s22, 0
      %p42 = por %p40, %p41
      %p43 = scmp.ne.s32.totalorder %s32, %s35
      %p44 = scmp.eq.s32.totalorder %s27, 1
      %p45 = por %p43, %p44
      %p46 = scmp.ne.s32.totalorder %s35, %s36
      %p47 = scmp.eq.s32.totalorder %s27, 0
      %p48 = por %p46, %p47
      %p49 = scmp.ne.s32.totalorder %s35, %s36
      %p50 = scmp.eq.s32.totalorder %s28, 1
      %p51 = por %p49, %p50
      %p53 = scmp.ne.s32.totalorder %s36, %s52
      %p54 = scmp.eq.s32.totalorder %s28, 0
      %p55 = por %p53, %p54
      %s57 = sadd.s32 %s56, 1
      %p60 = scmp.eq.s32.totalorder %s22, 1
      %p61 = scmp.ne.s32.totalorder %s56, %s58
      %p62 = scmp.eq.s32.totalorder %s22, 0
      %p63 = por %p61, %p62
      %p64 = scmp.ne.s32.totalorder %s56, %s58
      %p65 = scmp.eq.s32.totalorder %s27, 1
      %p66 = por %p64, %p65
      %p67 = scmp.ne.s32.totalorder %s58, %s59
      %p68 = scmp.eq.s32.totalorder %s27, 0
      %p69 = por %p67, %p68
      %p70 = scmp.ne.s32.totalorder %s58, %s59
      %p71 = scmp.eq.s32.totalorder %s28, 1
      %p72 = por %p70, %p71
      %p74 = scmp.ne.s32.totalorder %s59, %s73
      %p75 = scmp.eq.s32.totalorder %s28, 0
      %p76 = por %p74, %p75
      %s78 = sadd.s32 %s77, 1
      %p81 = scmp.eq.s32.totalorder %s22, 1
      %p82 = scmp.ne.s32.totalorder %s77, %s79
      %p83 = scmp.eq.s32.totalorder %s22, 0
      %p84 = por %p82, %p83
      %p85 = scmp.ne.s32.totalorder %s77, %s79
      %p86 = scmp.eq.s32.totalorder %s27, 1
      %p87 = por %p85, %p86
      %p88 = scmp.ne.s32.totalorder %s79, %s80
      %p89 = scmp.eq.s32.totalorder %s27, 0
      %p90 = por %p88, %p89
      %p91 = scmp.ne.s32.totalorder %s79, %s80
      %p92 = scmp.eq.s32.totalorder %s28, 1
      %p93 = por %p91, %p92
      %p95 = scmp.ne.s32.totalorder %s80, %s94
      %p96 = scmp.eq.s32.totalorder %s28, 0
      %p97 = por %p95, %p96
      %s99 = sadd.s32 %s98, 1
      %p102 = scmp.eq.s32.totalorder %s22, 1
      %p103 = scmp.ne.s32.totalorder %s98, %s100
      %p104 = scmp.eq.s32.totalorder %s22, 0
      %p105 = por %p103, %p104
      %p106 = scmp.ne.s32.totalorder %s98, %s100
      %p107 = scmp.eq.s32.totalorder %s27, 1
      %p108 = por %p106, %p107
      %p109 = scmp.ne.s32.totalorder %s100, %s101
      %p110 = scmp.eq.s32.totalorder %s27, 0
      %p111 = por %p109, %p110
      %p112 = scmp.ne.s32.totalorder %s100, %s101
      %p113 = scmp.eq.s32.totalorder %s28, 1
      %p114 = por %p112, %p113
      %p116 = scmp.ne.s32.totalorder %s101, %s115
      %p117 = scmp.eq.s32.totalorder %s28, 0
      %p118 = por %p116, %p117
      %s120 = sadd.s32 %s119, 1
      %p123 = scmp.eq.s32.totalorder %s22, 1
      %p124 = scmp.ne.s32.totalorder %s119, %s121
      %p125 = scmp.eq.s32.totalorder %s22, 0
      %p126 = por %p124, %p125
      %p127 = scmp.ne.s32.totalorder %s119, %s121
      %p128 = scmp.eq.s32.totalorder %s27, 1
      %p129 = por %p127, %p128
      %p130 = scmp.ne.s32.totalorder %s121, %s122
      %p131 = scmp.eq.s32.totalorder %s27, 0
      %p132 = por %p130, %p131
      %p133 = scmp.ne.s32.totalorder %s121, %s122
      %p134 = scmp.eq.s32.totalorder %s28, 1
      %p135 = por %p133, %p134
      %p137 = scmp.ne.s32.totalorder %s122, %s136
      %p138 = scmp.eq.s32.totalorder %s28, 0
      %p139 = por %p137, %p138
      %s141 = sadd.s32 %s140, 1
      %p144 = scmp.eq.s32.totalorder %s22, 1
      %p145 = scmp.ne.s32.totalorder %s140, %s142
      %p146 = scmp.eq.s32.totalorder %s22, 0
      %p147 = por %p145, %p146
      %p148 = scmp.ne.s32.totalorder %s140, %s142
      %p149 = scmp.eq.s32.totalorder %s27, 1
      %p150 = por %p148, %p149
      %p151 = scmp.ne.s32.totalorder %s142, %s143
      %p152 = scmp.eq.s32.totalorder %s27, 0
      %p153 = por %p151, %p152
      %p154 = scmp.ne.s32.totalorder %s142, %s143
      %p155 = scmp.eq.s32.totalorder %s28, 1
      %p156 = por %p154, %p155
      %p158 = scmp.ne.s32.totalorder %s143, %s157
      %p159 = scmp.eq.s32.totalorder %s28, 0
      %p160 = por %p158, %p159
      %s162 = sadd.s32 %s161, 1
      %p165 = scmp.eq.s32.totalorder %s22, 1
      %p166 = scmp.ne.s32.totalorder %s161, %s163
      %p167 = scmp.eq.s32.totalorder %s22, 0
      %p168 = por %p166, %p167
      %p169 = scmp.ne.s32.totalorder %s161, %s163
      %p170 = scmp.eq.s32.totalorder %s27, 1
      %p171 = por %p169, %p170
      %p172 = scmp.ne.s32.totalorder %s163, %s164
      %p173 = scmp.eq.s32.totalorder %s27, 0
      %p174 = por %p172, %p173
      %p175 = scmp.ne.s32.totalorder %s163, %s164
      %p176 = scmp.eq.s32.totalorder %s28, 1
      %p177 = por %p175, %p176
      %p179 = scmp.ne.s32.totalorder %s164, %s178
      %p180 = scmp.eq.s32.totalorder %s28, 0
      %p181 = por %p179, %p180
      %s183 = sadd.s32 %s182, 1
      %p186 = scmp.eq.s32.totalorder %s22, 1
      %p187 = scmp.ne.s32.totalorder %s182, %s184
      %p188 = scmp.eq.s32.totalorder %s22, 0
      %p189 = por %p187, %p188
      %p190 = scmp.ne.s32.totalorder %s182, %s184
      %p191 = scmp.eq.s32.totalorder %s27, 1
      %p192 = por %p190, %p191
      %p193 = scmp.ne.s32.totalorder %s184, %s185
      %p194 = scmp.eq.s32.totalorder %s27, 0
      %p195 = por %p193, %p194
      %p196 = scmp.ne.s32.totalorder %s184, %s185
      %p197 = scmp.eq.s32.totalorder %s28, 1
      %p198 = por %p196, %p197
      %p200 = scmp.ne.s32.totalorder %s185, %s199
      %p201 = scmp.eq.s32.totalorder %s28, 0
      %p202 = por %p200, %p201
      %s204 = sadd.s32 %s203, 1
      %p207 = scmp.eq.s32.totalorder %s22, 1
      %p208 = scmp.ne.s32.totalorder %s203, %s205
      %p209 = scmp.eq.s32.totalorder %s22, 0
      %p210 = por %p208, %p209
      %p211 = scmp.ne.s32.totalorder %s203, %s205
      %p212 = scmp.eq.s32.totalorder %s27, 1
      %p213 = por %p211, %p212
      %p214 = scmp.ne.s32.totalorder %s205, %s206
      %p215 = scmp.eq.s32.totalorder %s27, 0
      %p216 = por %p214, %p215
      %p217 = scmp.ne.s32.totalorder %s205, %s206
      %p218 = scmp.eq.s32.totalorder %s28, 1
      %p219 = por %p217, %p218
      %p221 = scmp.ne.s32.totalorder %s206, %s220
      %p222 = scmp.eq.s32.totalorder %s28, 0
      %p223 = por %p221, %p222
      %s225 = sadd.s32 %s224, 1
      %p228 = scmp.eq.s32.totalorder %s22, 1
      %p229 = scmp.ne.s32.totalorder %s224, %s226
      %p230 = scmp.eq.s32.totalorder %s22, 0
      %p231 = por %p229, %p230
      %p232 = scmp.ne.s32.totalorder %s224, %s226
      %p233 = scmp.eq.s32.totalorder %s27, 1
      %p234 = por %p232, %p233
      %p235 = scmp.ne.s32.totalorder %s226, %s227
      %p236 = scmp.eq.s32.totalorder %s27, 0
      %p237 = por %p235, %p236
      %p238 = scmp.ne.s32.totalorder %s226, %s227
      %p239 = scmp.eq.s32.totalorder %s28, 1
      %p240 = por %p238, %p239
      %p242 = scmp.ne.s32.totalorder %s227, %s241
      %p243 = scmp.eq.s32.totalorder %s28, 0
      %p244 = por %p242, %p243
      %s246 = sadd.s32 %s245, 1
      %p249 = scmp.eq.s32.totalorder %s22, 1
      %p250 = scmp.ne.s32.totalorder %s245, %s247
      %p251 = scmp.eq.s32.totalorder %s22, 0
      %p252 = por %p250, %p251
      %p253 = scmp.ne.s32.totalorder %s245, %s247
      %p254 = scmp.eq.s32.totalorder %s27, 1
      %p255 = por %p253, %p254
      %p256 = scmp.ne.s32.totalorder %s247, %s248
      %p257 = scmp.eq.s32.totalorder %s27, 0
      %p258 = por %p256, %p257
      %p259 = scmp.ne.s32.totalorder %s247, %s248
      %p260 = scmp.eq.s32.totalorder %s28, 1
      %p261 = por %p259, %p260
      %p263 = scmp.ne.s32.totalorder %s248, %s262
      %p264 = scmp.eq.s32.totalorder %s28, 0
      %p265 = por %p263, %p264
      %s267 = sadd.s32 %s266, 1
      %p270 = scmp.eq.s32.totalorder %s22, 1
      %p271 = scmp.ne.s32.totalorder %s266, %s268
      %p272 = scmp.eq.s32.totalorder %s22, 0
      %p273 = por %p271, %p272
      %p274 = scmp.ne.s32.totalorder %s266, %s268
      %p275 = scmp.eq.s32.totalorder %s27, 1
      %p276 = por %p274, %p275
      %p277 = scmp.ne.s32.totalorder %s268, %s269
      %p278 = scmp.eq.s32.totalorder %s27, 0
      %p279 = por %p277, %p278
      %p280 = scmp.ne.s32.totalorder %s268, %s269
      %p281 = scmp.eq.s32.totalorder %s28, 1
      %p282 = por %p280, %p281
      %p284 = scmp.ne.s32.totalorder %s269, %s283
      %p285 = scmp.eq.s32.totalorder %s28, 0
      %p286 = por %p284, %p285
      %s288 = sadd.s32 %s287, 1
      %p291 = scmp.eq.s32.totalorder %s22, 1
      %p292 = scmp.ne.s32.totalorder %s287, %s289
      %p293 = scmp.eq.s32.totalorder %s22, 0
      %p294 = por %p292, %p293
      %p295 = scmp.ne.s32.totalorder %s287, %s289
      %p296 = scmp.eq.s32.totalorder %s27, 1
      %p297 = por %p295, %p296
      %p298 = scmp.ne.s32.totalorder %s289, %s290
      %p299 = scmp.eq.s32.totalorder %s27, 0
      %p300 = por %p298, %p299
      %p301 = scmp.ne.s32.totalorder %s289, %s290
      %p302 = scmp.eq.s32.totalorder %s28, 1
      %p303 = por %p301, %p302
      %p305 = scmp.ne.s32.totalorder %s290, %s304
      %p306 = scmp.eq.s32.totalorder %s28, 0
      %p307 = por %p305, %p306
      %s308 = ssub.s32 %s22, %s29
      %p309 = scmp.eq.s32.totalorder %s308, 0
      %s311 = sadd.s32 %s310, 1
      %s312 = scalar_select %p309, %s310, %s311
      %p315 = pneg %p309
      %p316 = scmp.eq.s32.totalorder %s22, 1
      %p317 = por %p315, %p316
      %p318 = scmp.ne.s32.totalorder %s310, %s313
      %p319 = scmp.eq.s32.totalorder %s22, 0
      %p320 = por %p318, %p319
      %p321 = scmp.ne.s32.totalorder %s310, %s313
      %p322 = scmp.eq.s32.totalorder %s27, 1
      %p323 = por %p321, %p322
      %p324 = scmp.ne.s32.totalorder %s313, %s314
      %p325 = scmp.eq.s32.totalorder %s27, 0
      %p326 = por %p324, %p325
      %p327 = scmp.ne.s32.totalorder %s313, %s314
      %p328 = scmp.eq.s32.totalorder %s28, 1
      %p329 = por %p327, %p328
      %p331 = scmp.ne.s32.totalorder %s314, %s330
      %p332 = scmp.eq.s32.totalorder %s28, 0
      %p333 = por %p331, %p332
      %p334 = scmp.le.s32.totalorder 1, %s22
      %p335 = scmp.lt.s32.totalorder %s22, 3
      %p336 = pnand %p334, %p335
      %p337 = pneg %p336
      // Predicated region
      $region9: #{denoising_ae_forward.1} parent=5 // pred_check
        _
      $region10: #{denoising_ae_forward.1} parent=5 // pred_check_branch
        %339 = sbr.rel (%p336) target = $region12
      $region11: #{denoising_ae_forward.1} parent=5 // pred_region
        %s340 = ssub.s32 %s22, 1
        // Predicated region
        $region13: #{denoising_ae_forward.1} parent=11 // pred_check
          %p341 = pneg %p69
        $region14: #{denoising_ae_forward.1} parent=11 // pred_check_branch
          %343 = sbr.rel (%p341) target = $region16
        $region15: #{denoising_ae_forward.1} parent=11 // pred_region
          _
        $region16: #{denoising_ae_forward.1} parent=11 // pred_fallthru
          _
        // Predicated region
        $region17: #{denoising_ae_forward.1} parent=11 // pred_check
          %p344 = pneg %p90
        $region18: #{denoising_ae_forward.1} parent=11 // pred_check_branch
          %346 = sbr.rel (%p344) target = $region20
        $region19: #{denoising_ae_forward.1} parent=11 // pred_region
          _
        $region20: #{denoising_ae_forward.1} parent=11 // pred_fallthru
          _
        // Predicated region
        $region21: #{denoising_ae_forward.1} parent=11 // pred_check
          %p347 = pneg %p111
        $region22: #{denoising_ae_forward.1} parent=11 // pred_check_branch
          %349 = sbr.rel (%p347) target = $region24
        $region23: #{denoising_ae_forward.1} parent=11 // pred_region
          _
        $region24: #{denoising_ae_forward.1} parent=11 // pred_fallthru
          _
        // Predicated region
        $region25: #{denoising_ae_forward.1} parent=11 // pred_check
          %p350 = pneg %p132
        $region26: #{denoising_ae_forward.1} parent=11 // pred_check_branch
          %352 = sbr.rel (%p350) target = $region28
        $region27: #{denoising_ae_forward.1} parent=11 // pred_region
          _
        $region28: #{denoising_ae_forward.1} parent=11 // pred_fallthru
          _
        // Predicated region
        $region29: #{denoising_ae_forward.1} parent=11 // pred_check
          %p353 = pneg %p153
        $region30: #{denoising_ae_forward.1} parent=11 // pred_check_branch
          %355 = sbr.rel (%p353) target = $region32
        $region31: #{denoising_ae_forward.1} parent=11 // pred_region
          _
        $region32: #{denoising_ae_forward.1} parent=11 // pred_fallthru
          _
        // Predicated region
        $region33: #{denoising_ae_forward.1} parent=11 // pred_check
          %p356 = pneg %p174
        $region34: #{denoising_ae_forward.1} parent=11 // pred_check_branch
          %358 = sbr.rel (%p356) target = $region36
        $region35: #{denoising_ae_forward.1} parent=11 // pred_region
          _
        $region36: #{denoising_ae_forward.1} parent=11 // pred_fallthru
          _
        // Predicated region
        $region37: #{denoising_ae_forward.1} parent=11 // pred_check
          %p359 = pneg %p195
        $region38: #{denoising_ae_forward.1} parent=11 // pred_check_branch
          %361 = sbr.rel (%p359) target = $region40
        $region39: #{denoising_ae_forward.1} parent=11 // pred_region
          _
        $region40: #{denoising_ae_forward.1} parent=11 // pred_fallthru
          _
        // Predicated region
        $region41: #{denoising_ae_forward.1} parent=11 // pred_check
          %p362 = pneg %p216
        $region42: #{denoising_ae_forward.1} parent=11 // pred_check_branch
          %364 = sbr.rel (%p362) target = $region44
        $region43: #{denoising_ae_forward.1} parent=11 // pred_region
          _
        $region44: #{denoising_ae_forward.1} parent=11 // pred_fallthru
          _
        // Predicated region
        $region45: #{denoising_ae_forward.1} parent=11 // pred_check
          %p365 = pneg %p237
        $region46: #{denoising_ae_forward.1} parent=11 // pred_check_branch
          %367 = sbr.rel (%p365) target = $region48
        $region47: #{denoising_ae_forward.1} parent=11 // pred_region
          _
        $region48: #{denoising_ae_forward.1} parent=11 // pred_fallthru
          _
        // Predicated region
        $region49: #{denoising_ae_forward.1} parent=11 // pred_check
          %p368 = pneg %p258
        $region50: #{denoising_ae_forward.1} parent=11 // pred_check_branch
          %370 = sbr.rel (%p368) target = $region52
        $region51: #{denoising_ae_forward.1} parent=11 // pred_region
          _
        $region52: #{denoising_ae_forward.1} parent=11 // pred_fallthru
          _
        // Predicated region
        $region53: #{denoising_ae_forward.1} parent=11 // pred_check
          %p371 = pneg %p279
        $region54: #{denoising_ae_forward.1} parent=11 // pred_check_branch
          %373 = sbr.rel (%p371) target = $region56
        $region55: #{denoising_ae_forward.1} parent=11 // pred_region
          _
        $region56: #{denoising_ae_forward.1} parent=11 // pred_fallthru
          _
        // Predicated region
        $region57: #{denoising_ae_forward.1} parent=11 // pred_check
          %p374 = pneg %p300
        $region58: #{denoising_ae_forward.1} parent=11 // pred_check_branch
          %376 = sbr.rel (%p374) target = $region60
        $region59: #{denoising_ae_forward.1} parent=11 // pred_region
          _
        $region60: #{denoising_ae_forward.1} parent=11 // pred_fallthru
          _
      $region12: #{denoising_ae_forward.1} parent=5 // pred_fallthru
        _
      %p377 = scmp.lt.s32.totalorder %s22, 2
      // Predicated region
      $region61: #{denoising_ae_forward.1} parent=5 // pred_check
        %p378 = pneg %p377
      $region62: #{denoising_ae_forward.1} parent=5 // pred_check_branch
        %380 = sbr.rel (%p378) target = $region64
      $region63: #{denoising_ae_forward.1} parent=5 // pred_region
        // Predicated region
        $region65: #{denoising_ae_forward.1} parent=63 // pred_check
          %p381 = pneg %p42
        $region66: #{denoising_ae_forward.1} parent=63 // pred_check_branch
          %383 = sbr.rel (%p381) target = $region68
        $region67: #{denoising_ae_forward.1} parent=63 // pred_region
          %s384 = smul.u32 4, %s22
          %s385 = ssub.s32 6, %s384
          %p386 = scmp.lt.s32.totalorder %s385, 4
          %s387 = scalar_select %p386, %s385, 4
          %s388 = smul.u32 128, %s387
          %s389 = smul.u32 %s388, 7
          %p390 = scmp.lt.s32.totalorder %s384, 5
          %s391 = scalar_select %p390, %s384, 5
          %s392 = smul.addr %s391, 7
          %s393 = smul.addr %s392, 8
          %s394 = scalar_lea.vmem %s0, %s393
          %s395 = smul.u32 4, %s22
          %s396 = ssub.s32 6, %s395
          %p397 = scmp.lt.s32.totalorder %s396, 4
          %s398 = scalar_select %p397, %s396, 4
          %s399 = smul.u32 128, %s398
          %s400 = smul.u32 %s399, 7
        $region68: #{denoising_ae_forward.1} parent=63 // pred_fallthru
          _
      $region64: #{denoising_ae_forward.1} parent=5 // pred_fallthru
        _
      %p401 = scmp.le.s32.totalorder 1, %s22
      %p402 = scmp.lt.s32.totalorder %s22, 3
      %p403 = pnand %p401, %p402
      %p404 = pneg %p403
      // Predicated region
      $region69: #{denoising_ae_forward.1} parent=5 // pred_check
        _
      $region70: #{denoising_ae_forward.1} parent=5 // pred_check_branch
        %406 = sbr.rel (%p403) target = $region72
      $region71: #{denoising_ae_forward.1} parent=5 // pred_region
        %s407 = ssub.s32 %s22, 1
        %s408 = smul.u32 4, %s27
        %s409 = ssub.s32 6, %s408
        %p410 = scmp.lt.s32.totalorder %s409, 4
        %s411 = scalar_select %p410, %s409, 4
        %s412 = smul.u32 128, %s411
        %s413 = smul.u32 %s412, 7
        %p414 = scmp.lt.s32.totalorder %s408, 5
        %s415 = scalar_select %p414, %s408, 5
        %s416 = smul.addr %s415, 7
        %s417 = smul.addr %s416, 8
        %s418 = scalar_lea.vmem %s0, %s417
        %p419 = pneg %p48
        %p420 = pneg %p45
        %p421 = pneg %p69
        %p422 = pneg %p66
        %p423 = pneg %p90
        %p424 = pneg %p87
        %p425 = pneg %p111
        %p426 = pneg %p108
        %p427 = pneg %p132
        %p428 = pneg %p129
        %p429 = pneg %p153
        %p430 = pneg %p150
        %p431 = pneg %p174
        %p432 = pneg %p171
        %p433 = pneg %p195
        %p434 = pneg %p192
        %p435 = pneg %p216
        %p436 = pneg %p213
        %p437 = pneg %p237
        %p438 = pneg %p234
        %p439 = pneg %p258
        %p440 = pneg %p255
        %p441 = pneg %p279
        %p442 = pneg %p276
        %p443 = pneg %p300
        %p444 = pneg %p297
        %p445 = pneg %p326
        %p446 = pneg %p323
        %s447 = sand.u32 %s313, 1
        %s448 = scalar_lea.sflag [#allocation3], %s447
        %s449 = sand.u32 %s313, 1
        %s450 = smul.addr %s449, 224
        %s451 = scalar_lea.vmem [#allocation2], %s450
        %s452 = smul.u32 4, %s27
        %s453 = ssub.s32 6, %s452
        %p454 = scmp.lt.s32.totalorder %s453, 4
        %s455 = scalar_select %p454, %s453, 4
        %s456 = smul.u32 128, %s455
        %s457 = smul.u32 %s456, 7
        %p458 = scmp.lt.s32.totalorder %s452, 5
        %s459 = scalar_select %p458, %s452, 5
        %s460 = smul.addr %s459, 7
        %s461 = smul.addr %s460, 8
        %s462 = scalar_lea.vmem %s0, %s461
        %s463 = smul.u32 4, %s27
        %s464 = ssub.s32 6, %s463
        %p465 = scmp.lt.s32.totalorder %s464, 4
        %s466 = scalar_select %p465, %s464, 4
        %s467 = smul.u32 128, %s466
        %s468 = smul.u32 %s467, 7
        %s469 = smul.u32 4, %s27
        %s470 = ssub.s32 6, %s469
        %p471 = scmp.lt.s32.totalorder %s470, 4
        %s472 = scalar_select %p471, %s470, 4
        %s473 = smul.u32 128, %s472
        %s474 = smul.u32 %s473, 7
        %v476 = vld [vmem:[%s462] sm:$0xff]
        %v477 = vld [vmem:[%s462 + $0x8] sm:$0xff]
        %v478 = vld [vmem:[%s462 + $0x10] sm:$0xff]
        %v479 = vld [vmem:[%s462 + $0x18] sm:$0xff]
        %v480 = vld [vmem:[%s462 + $0x20] sm:$0xff]
        %v481 = vld [vmem:[%s462 + $0x28] sm:$0xff]
        %v482 = vld [vmem:[%s462 + $0x30] sm:$0xff]
        %v483 = vld [vmem:[%s462 + $0x38] sm:$0xff]
        %v484 = vld [vmem:[%s462 + $0x40] sm:$0xff]
        %v485 = vld [vmem:[%s462 + $0x48] sm:$0xff]
        %v486 = vld [vmem:[%s462 + $0x50] sm:$0xff]
        %v487 = vld [vmem:[%s462 + $0x58] sm:$0xff]
        %v488 = vld [vmem:[%s462 + $0x60] sm:$0xff]
        %v489 = vld [vmem:[%s462 + $0x68] sm:$0xff]
        %v490 = vld [vmem:[%s462 + $0x70] sm:$0xff]
        %v491 = vld [vmem:[%s462 + $0x78] sm:$0xff]
        %v492 = vld [vmem:[%s462 + $0x80] sm:$0xff]
        %v493 = vld [vmem:[%s462 + $0x88] sm:$0xff]
        %v494 = vld [vmem:[%s462 + $0x90] sm:$0xff]
        %v495 = vld [vmem:[%s462 + $0x98] sm:$0xff]
        %v496 = vld [vmem:[%s462 + $0xa0] sm:$0xff]
        %v497 = vld [vmem:[%s462 + $0xa8] sm:$0xff]
        %v498 = vld [vmem:[%s462 + $0xb0] sm:$0xff]
        %v499 = vld [vmem:[%s462 + $0xb8] sm:$0xff]
        %v500 = vld [vmem:[%s462 + $0xc0] sm:$0xff]
        %v501 = vld [vmem:[%s462 + $0xc8] sm:$0xff]
        %v502 = vld [vmem:[%s462 + $0xd0] sm:$0xff]
        %v503 = vld [vmem:[%s462 + $0xd8] sm:$0xff]
        %v504 = vpack.c.bf16 %v483, %v476
        %v505 = vpack.c.bf16 %v484, %v477
        %v506 = vpack.c.bf16 %v485, %v478
        %v507 = vpack.c.bf16 %v486, %v479
        %v508 = vpack.c.bf16 %v487, %v480
        %v509 = vpack.c.bf16 %v488, %v481
        %v510 = vpack.c.bf16 %v489, %v482
        %v511 = vpack.c.bf16 %v497, %v490
        %v512 = vpack.c.bf16 %v498, %v491
        %v513 = vpack.c.bf16 %v499, %v492
        %v514 = vpack.c.bf16 %v500, %v493
        %v515 = vpack.c.bf16 %v501, %v494
        %v516 = vpack.c.bf16 %v502, %v495
        %v517 = vpack.c.bf16 %v503, %v496
        %v518 = vld [vmem:[%s1] sm:$0xff]
        %v519 = vld [vmem:[%s1 + $0x8] sm:$0xff]
        %v520 = vld [vmem:[%s1 + $0x10] sm:$0xff]
        %v521 = vld [vmem:[%s1 + $0x18] sm:$0xff]
        %v522 = vld [vmem:[%s1 + $0x20] sm:$0xff]
        %v523 = vld [vmem:[%s1 + $0x28] sm:$0xff]
        %v524 = vld [vmem:[%s1 + $0x30] sm:$0xff]
        %v525 = vld [vmem:[%s1 + $0x38] sm:$0xff]
        %v526 = vld [vmem:[%s1 + $0x40] sm:$0xff]
        %v527 = vld [vmem:[%s1 + $0x48] sm:$0xff]
        %v528 = vld [vmem:[%s1 + $0x50] sm:$0xff]
        %v529 = vld [vmem:[%s1 + $0x58] sm:$0xff]
        %v530 = vld [vmem:[%s1 + $0x60] sm:$0xff]
        %v531 = vld [vmem:[%s1 + $0x68] sm:$0xff]
        %v532 = vld [vmem:[%s1 + $0x70] sm:$0xff]
        %v533 = vld [vmem:[%s1 + $0x78] sm:$0xff]
        %v534 = vld [vmem:[%s1 + $0x80] sm:$0xff]
        %v535 = vld [vmem:[%s1 + $0x88] sm:$0xff]
        %v536 = vld [vmem:[%s1 + $0x90] sm:$0xff]
        %v537 = vld [vmem:[%s1 + $0x98] sm:$0xff]
        %v538 = vld [vmem:[%s1 + $0xa0] sm:$0xff]
        %v539 = vld [vmem:[%s1 + $0xa8] sm:$0xff]
        %v540 = vld [vmem:[%s1 + $0xb0] sm:$0xff]
        %v541 = vld [vmem:[%s1 + $0xb8] sm:$0xff]
        %v542 = vld [vmem:[%s1 + $0xc0] sm:$0xff]
        %v543 = vld [vmem:[%s1 + $0xc8] sm:$0xff]
        %v544 = vld [vmem:[%s1 + $0xd0] sm:$0xff]
        %v545 = vld [vmem:[%s1 + $0xd8] sm:$0xff]
        %v546 = vld [vmem:[%s1 + $0xe0] sm:$0xff]
        %v547 = vld [vmem:[%s1 + $0xe8] sm:$0xff]
        %v548 = vld [vmem:[%s1 + $0xf0] sm:$0xff]
        %v549 = vld [vmem:[%s1 + $0xf8] sm:$0xff]
        %v550 = vld [vmem:[%s1 + $0x100] sm:$0xff]
        %v551 = vld [vmem:[%s1 + $0x108] sm:$0xff]
        %v552 = vld [vmem:[%s1 + $0x110] sm:$0xff]
        %v553 = vld [vmem:[%s1 + $0x118] sm:$0xff]
        %v554 = vld [vmem:[%s1 + $0x120] sm:$0xff]
        %v555 = vld [vmem:[%s1 + $0x128] sm:$0xff]
        %v556 = vld [vmem:[%s1 + $0x130] sm:$0xff]
        %v557 = vld [vmem:[%s1 + $0x138] sm:$0xff]
        %v558 = vld [vmem:[%s1 + $0x140] sm:$0xff]
        %v559 = vld [vmem:[%s1 + $0x148] sm:$0xff]
        %v560 = vld [vmem:[%s1 + $0x150] sm:$0xff]
        %v561 = vld [vmem:[%s1 + $0x158] sm:$0xff]
        %v562 = vld [vmem:[%s1 + $0x160] sm:$0xff]
        %v563 = vld [vmem:[%s1 + $0x168] sm:$0xff]
        %v564 = vld [vmem:[%s1 + $0x170] sm:$0xff]
        %v565 = vld [vmem:[%s1 + $0x178] sm:$0xff]
        %v566 = vld [vmem:[%s1 + $0x180] sm:$0xff]
        %v567 = vld [vmem:[%s1 + $0x188] sm:$0xff]
        %v568 = vld [vmem:[%s1 + $0x190] sm:$0xff]
        %v569 = vld [vmem:[%s1 + $0x198] sm:$0xff]
        %v570 = vld [vmem:[%s1 + $0x1a0] sm:$0xff]
        %v571 = vld [vmem:[%s1 + $0x1a8] sm:$0xff]
        %v572 = vld [vmem:[%s1 + $0x1b0] sm:$0xff]
        %v573 = vld [vmem:[%s1 + $0x1b8] sm:$0xff]
        %v574 = vld [vmem:[%s1 + $0x1c0] sm:$0xff]
        %v575 = vld [vmem:[%s1 + $0x1c8] sm:$0xff]
        %v576 = vld [vmem:[%s1 + $0x1d0] sm:$0xff]
        %v577 = vld [vmem:[%s1 + $0x1d8] sm:$0xff]
        %v578 = vld [vmem:[%s1 + $0x1e0] sm:$0xff]
        %v579 = vld [vmem:[%s1 + $0x1e8] sm:$0xff]
        %v580 = vld [vmem:[%s1 + $0x1f0] sm:$0xff]
        %v581 = vld [vmem:[%s1 + $0x1f8] sm:$0xff]
        %v582 = vld [vmem:[%s1 + $0x200] sm:$0xff]
        %v583 = vld [vmem:[%s1 + $0x208] sm:$0xff]
        %v584 = vld [vmem:[%s1 + $0x210] sm:$0xff]
        %v585 = vld [vmem:[%s1 + $0x218] sm:$0xff]
        %v586 = vld [vmem:[%s1 + $0x220] sm:$0xff]
        %v587 = vld [vmem:[%s1 + $0x228] sm:$0xff]
        %v588 = vld [vmem:[%s1 + $0x230] sm:$0xff]
        %v589 = vld [vmem:[%s1 + $0x238] sm:$0xff]
        %v590 = vld [vmem:[%s1 + $0x240] sm:$0xff]
        %v591 = vld [vmem:[%s1 + $0x248] sm:$0xff]
        %v592 = vld [vmem:[%s1 + $0x250] sm:$0xff]
        %v593 = vld [vmem:[%s1 + $0x258] sm:$0xff]
        %v594 = vld [vmem:[%s1 + $0x260] sm:$0xff]
        %v595 = vld [vmem:[%s1 + $0x268] sm:$0xff]
        %v596 = vld [vmem:[%s1 + $0x270] sm:$0xff]
        %v597 = vld [vmem:[%s1 + $0x278] sm:$0xff]
        %v598 = vld [vmem:[%s1 + $0x280] sm:$0xff]
        %v599 = vld [vmem:[%s1 + $0x288] sm:$0xff]
        %v600 = vld [vmem:[%s1 + $0x290] sm:$0xff]
        %v601 = vld [vmem:[%s1 + $0x298] sm:$0xff]
        %v602 = vld [vmem:[%s1 + $0x2a0] sm:$0xff]
        %v603 = vld [vmem:[%s1 + $0x2a8] sm:$0xff]
        %v604 = vld [vmem:[%s1 + $0x2b0] sm:$0xff]
        %v605 = vld [vmem:[%s1 + $0x2b8] sm:$0xff]
        %v606 = vld [vmem:[%s1 + $0x2c0] sm:$0xff]
        %v607 = vld [vmem:[%s1 + $0x2c8] sm:$0xff]
        %v608 = vld [vmem:[%s1 + $0x2d0] sm:$0xff]
        %v609 = vld [vmem:[%s1 + $0x2d8] sm:$0xff]
        %v610 = vld [vmem:[%s1 + $0x2e0] sm:$0xff]
        %v611 = vld [vmem:[%s1 + $0x2e8] sm:$0xff]
        %v612 = vld [vmem:[%s1 + $0x2f0] sm:$0xff]
        %v613 = vld [vmem:[%s1 + $0x2f8] sm:$0xff]
        %v614 = vld [vmem:[%s1 + $0x300] sm:$0xff]
        %v615 = vld [vmem:[%s1 + $0x308] sm:$0xff]
        %v616 = vld [vmem:[%s2] sm:$0x3]
        %v618 = vlaneseq
        %v619 = vshrl.u32 %v618, 7
        %v620 = vsub.s32 0, %v619
        %v621 = vrot.slane %v616, %v620
        %v622 = vlaneseq
        %v623 = vshrl.u32 %v622, 7
        %v624 = vsub.s32 1, %v623
        %v625 = vrot.slane %v616, %v624
        %v726 = vunpack.c.l.b16 %v518
        %v727 = vunpack.c.h.b16 %v518
        %v728 = vunpack.c.l.b16 %v519
        %v729 = vunpack.c.h.b16 %v519
        %v730 = vunpack.c.l.b16 %v520
        %v731 = vunpack.c.h.b16 %v520
        %v732 = vunpack.c.l.b16 %v521
        %v733 = vunpack.c.h.b16 %v521
        %v734 = vunpack.c.l.b16 %v522
        %v735 = vunpack.c.h.b16 %v522
        %v736 = vunpack.c.l.b16 %v523
        %v737 = vunpack.c.h.b16 %v523
        %v738 = vunpack.c.l.b16 %v524
        %v739 = vunpack.c.h.b16 %v524
        %v740 = vunpack.c.l.b16 %v525
        %v741 = vunpack.c.h.b16 %v525
        %v742 = vunpack.c.l.b16 %v526
        %v743 = vunpack.c.h.b16 %v526
        %v744 = vunpack.c.l.b16 %v527
        %v745 = vunpack.c.h.b16 %v527
        %v746 = vunpack.c.l.b16 %v528
        %v747 = vunpack.c.h.b16 %v528
        %v748 = vunpack.c.l.b16 %v529
        %v749 = vunpack.c.h.b16 %v529
        %v750 = vunpack.c.l.b16 %v530
        %v751 = vunpack.c.h.b16 %v530
        %v752 = vunpack.c.l.b16 %v531
        %v753 = vunpack.c.h.b16 %v531
        %v754 = vunpack.c.l.b16 %v532
        %v755 = vunpack.c.h.b16 %v532
        %v756 = vunpack.c.l.b16 %v533
        %v757 = vunpack.c.h.b16 %v533
        %v758 = vunpack.c.l.b16 %v534
        %v759 = vunpack.c.h.b16 %v534
        %v760 = vunpack.c.l.b16 %v535
        %v761 = vunpack.c.h.b16 %v535
        %v762 = vunpack.c.l.b16 %v536
        %v763 = vunpack.c.h.b16 %v536
        %v764 = vunpack.c.l.b16 %v537
        %v765 = vunpack.c.h.b16 %v537
        %v766 = vunpack.c.l.b16 %v538
        %v767 = vunpack.c.h.b16 %v538
        %v768 = vunpack.c.l.b16 %v539
        %v769 = vunpack.c.h.b16 %v539
        %v770 = vunpack.c.l.b16 %v540
        %v771 = vunpack.c.h.b16 %v540
        %v772 = vunpack.c.l.b16 %v541
        %v773 = vunpack.c.h.b16 %v541
        %v774 = vunpack.c.l.b16 %v542
        %v775 = vunpack.c.h.b16 %v542
        %v776 = vunpack.c.l.b16 %v543
        %v777 = vunpack.c.h.b16 %v543
        %v778 = vunpack.c.l.b16 %v544
        %v779 = vunpack.c.h.b16 %v544
        %v780 = vunpack.c.l.b16 %v545
        %v781 = vunpack.c.h.b16 %v545
        %v782 = vunpack.c.l.b16 %v546
        %v783 = vunpack.c.h.b16 %v546
        %v784 = vunpack.c.l.b16 %v547
        %v785 = vunpack.c.h.b16 %v547
        %v786 = vunpack.c.l.b16 %v548
        %v787 = vunpack.c.h.b16 %v548
        %v788 = vunpack.c.l.b16 %v549
        %v789 = vunpack.c.h.b16 %v549
        %v790 = vunpack.c.l.b16 %v550
        %v791 = vunpack.c.h.b16 %v550
        %v792 = vunpack.c.l.b16 %v551
        %v793 = vunpack.c.h.b16 %v551
        %v794 = vunpack.c.l.b16 %v552
        %v795 = vunpack.c.h.b16 %v552
        %v796 = vunpack.c.l.b16 %v553
        %v797 = vunpack.c.h.b16 %v553
        %v798 = vunpack.c.l.b16 %v554
        %v799 = vunpack.c.h.b16 %v554
        %v800 = vunpack.c.l.b16 %v555
        %v801 = vunpack.c.h.b16 %v555
        %v802 = vunpack.c.l.b16 %v556
        %v803 = vunpack.c.h.b16 %v556
        %v804 = vunpack.c.l.b16 %v557
        %v805 = vunpack.c.h.b16 %v557
        %v806 = vunpack.c.l.b16 %v558
        %v807 = vunpack.c.h.b16 %v558
        %v808 = vunpack.c.l.b16 %v559
        %v809 = vunpack.c.h.b16 %v559
        %v810 = vunpack.c.l.b16 %v560
        %v811 = vunpack.c.h.b16 %v560
        %v812 = vunpack.c.l.b16 %v561
        %v813 = vunpack.c.h.b16 %v561
        %v814 = vunpack.c.l.b16 %v562
        %v815 = vunpack.c.h.b16 %v562
        %v816 = vunpack.c.l.b16 %v563
        %v817 = vunpack.c.h.b16 %v563
        %v818 = vunpack.c.l.b16 %v564
        %v819 = vunpack.c.h.b16 %v564
        %v820 = vunpack.c.l.b16 %v565
        %v821 = vunpack.c.h.b16 %v565
        %v822 = vunpack.c.l.b16 %v566
        %v823 = vunpack.c.h.b16 %v566
        %v824 = vunpack.c.l.b16 %v567
        %v825 = vunpack.c.h.b16 %v567
        %v826 = vunpack.c.l.b16 %v568
        %v827 = vunpack.c.h.b16 %v568
        %v828 = vunpack.c.l.b16 %v569
        %v829 = vunpack.c.h.b16 %v569
        %v830 = vunpack.c.l.b16 %v570
        %v831 = vunpack.c.h.b16 %v570
        %v832 = vunpack.c.l.b16 %v571
        %v833 = vunpack.c.h.b16 %v571
        %v834 = vunpack.c.l.b16 %v572
        %v835 = vunpack.c.h.b16 %v572
        %v836 = vunpack.c.l.b16 %v573
        %v837 = vunpack.c.h.b16 %v573
        %v838 = vunpack.c.l.b16 %v574
        %v839 = vunpack.c.h.b16 %v574
        %v840 = vunpack.c.l.b16 %v575
        %v841 = vunpack.c.h.b16 %v575
        %v842 = vunpack.c.l.b16 %v576
        %v843 = vunpack.c.h.b16 %v576
        %v844 = vunpack.c.l.b16 %v577
        %v845 = vunpack.c.h.b16 %v577
        %v846 = vunpack.c.l.b16 %v578
        %v847 = vunpack.c.h.b16 %v578
        %v848 = vunpack.c.l.b16 %v579
        %v849 = vunpack.c.h.b16 %v579
        %v850 = vunpack.c.l.b16 %v580
        %v851 = vunpack.c.h.b16 %v580
        %v852 = vunpack.c.l.b16 %v581
        %v853 = vunpack.c.h.b16 %v581
        %v854 = vunpack.c.l.b16 %v582
        %v855 = vunpack.c.h.b16 %v582
        %v856 = vunpack.c.l.b16 %v583
        %v857 = vunpack.c.h.b16 %v583
        %v858 = vunpack.c.l.b16 %v584
        %v859 = vunpack.c.h.b16 %v584
        %v860 = vunpack.c.l.b16 %v585
        %v861 = vunpack.c.h.b16 %v585
        %v862 = vunpack.c.l.b16 %v586
        %v863 = vunpack.c.h.b16 %v586
        %v864 = vunpack.c.l.b16 %v587
        %v865 = vunpack.c.h.b16 %v587
        %v866 = vunpack.c.l.b16 %v588
        %v867 = vunpack.c.h.b16 %v588
        %v868 = vunpack.c.l.b16 %v589
        %v869 = vunpack.c.h.b16 %v589
        %v870 = vunpack.c.l.b16 %v590
        %v871 = vunpack.c.h.b16 %v590
        %v872 = vunpack.c.l.b16 %v591
        %v873 = vunpack.c.h.b16 %v591
        %v874 = vunpack.c.l.b16 %v592
        %v875 = vunpack.c.h.b16 %v592
        %v876 = vunpack.c.l.b16 %v593
        %v877 = vunpack.c.h.b16 %v593
        %v878 = vunpack.c.l.b16 %v594
        %v879 = vunpack.c.h.b16 %v594
        %v880 = vunpack.c.l.b16 %v595
        %v881 = vunpack.c.h.b16 %v595
        %v882 = vunpack.c.l.b16 %v596
        %v883 = vunpack.c.h.b16 %v596
        %v884 = vunpack.c.l.b16 %v597
        %v885 = vunpack.c.h.b16 %v597
        %v886 = vunpack.c.l.b16 %v598
        %v887 = vunpack.c.h.b16 %v598
        %v888 = vunpack.c.l.b16 %v599
        %v889 = vunpack.c.h.b16 %v599
        %v890 = vunpack.c.l.b16 %v600
        %v891 = vunpack.c.h.b16 %v600
        %v892 = vunpack.c.l.b16 %v601
        %v893 = vunpack.c.h.b16 %v601
        %v894 = vunpack.c.l.b16 %v602
        %v895 = vunpack.c.h.b16 %v602
        %v896 = vunpack.c.l.b16 %v603
        %v897 = vunpack.c.h.b16 %v603
        %v898 = vunpack.c.l.b16 %v604
        %v899 = vunpack.c.h.b16 %v604
        %v900 = vunpack.c.l.b16 %v605
        %v901 = vunpack.c.h.b16 %v605
        %v902 = vunpack.c.l.b16 %v606
        %v903 = vunpack.c.h.b16 %v606
        %v904 = vunpack.c.l.b16 %v607
        %v905 = vunpack.c.h.b16 %v607
        %v906 = vunpack.c.l.b16 %v608
        %v907 = vunpack.c.h.b16 %v608
        %v908 = vunpack.c.l.b16 %v609
        %v909 = vunpack.c.h.b16 %v609
        %v910 = vunpack.c.l.b16 %v610
        %v911 = vunpack.c.h.b16 %v610
        %v912 = vunpack.c.l.b16 %v611
        %v913 = vunpack.c.h.b16 %v611
        %v914 = vunpack.c.l.b16 %v612
        %v915 = vunpack.c.h.b16 %v612
        %v916 = vunpack.c.l.b16 %v613
        %v917 = vunpack.c.h.b16 %v613
        %v918 = vunpack.c.l.b16 %v614
        %v919 = vunpack.c.h.b16 %v614
        %v920 = vunpack.c.l.b16 %v615
        %v921 = vunpack.c.h.b16 %v615
        %v922 = vpack.c.b16 %v728, %v726
        %v923 = vpack.c.b16 %v729, %v727
        %v924 = vpack.c.b16 %v732, %v730
        %v925 = vpack.c.b16 %v733, %v731
        %v926 = vpack.c.b16 %v736, %v734
        %v927 = vpack.c.b16 %v737, %v735
        %v928 = vpack.c.b16 %v740, %v738
        %v929 = vpack.c.b16 %v741, %v739
        %v930 = vpack.c.b16 %v744, %v742
        %v931 = vpack.c.b16 %v745, %v743
        %v932 = vpack.c.b16 %v748, %v746
        %v933 = vpack.c.b16 %v749, %v747
        %v934 = vpack.c.b16 %v752, %v750
        %v935 = vpack.c.b16 %v753, %v751
        %v936 = vpack.c.b16 %v756, %v754
        %v937 = vpack.c.b16 %v757, %v755
        %v938 = vpack.c.b16 %v760, %v758
        %v939 = vpack.c.b16 %v761, %v759
        %v940 = vpack.c.b16 %v764, %v762
        %v941 = vpack.c.b16 %v765, %v763
        %v942 = vpack.c.b16 %v768, %v766
        %v943 = vpack.c.b16 %v769, %v767
        %v944 = vpack.c.b16 %v772, %v770
        %v945 = vpack.c.b16 %v773, %v771
        %v946 = vpack.c.b16 %v776, %v774
        %v947 = vpack.c.b16 %v777, %v775
        %v948 = vpack.c.b16 %v780, %v778
        %v949 = vpack.c.b16 %v781, %v779
        %v950 = vpack.c.b16 %v784, %v782
        %v951 = vpack.c.b16 %v785, %v783
        %v952 = vpack.c.b16 %v788, %v786
        %v953 = vpack.c.b16 %v789, %v787
        %v954 = vpack.c.b16 %v792, %v790
        %v955 = vpack.c.b16 %v793, %v791
        %v956 = vpack.c.b16 %v796, %v794
        %v957 = vpack.c.b16 %v797, %v795
        %v958 = vpack.c.b16 %v800, %v798
        %v959 = vpack.c.b16 %v801, %v799
        %v960 = vpack.c.b16 %v804, %v802
        %v961 = vpack.c.b16 %v805, %v803
        %v962 = vpack.c.b16 %v808, %v806
        %v963 = vpack.c.b16 %v809, %v807
        %v964 = vpack.c.b16 %v812, %v810
        %v965 = vpack.c.b16 %v813, %v811
        %v966 = vpack.c.b16 %v816, %v814
        %v967 = vpack.c.b16 %v817, %v815
        %v968 = vpack.c.b16 %v820, %v818
        %v969 = vpack.c.b16 %v821, %v819
        %v970 = vpack.c.b16 %v824, %v822
        %v971 = vpack.c.b16 %v825, %v823
        %v972 = vpack.c.b16 %v828, %v826
        %v973 = vpack.c.b16 %v829, %v827
        %v974 = vpack.c.b16 %v832, %v830
        %v975 = vpack.c.b16 %v833, %v831
        %v976 = vpack.c.b16 %v836, %v834
        %v977 = vpack.c.b16 %v837, %v835
        %v978 = vpack.c.b16 %v840, %v838
        %v979 = vpack.c.b16 %v841, %v839
        %v980 = vpack.c.b16 %v844, %v842
        %v981 = vpack.c.b16 %v845, %v843
        %v982 = vpack.c.b16 %v848, %v846
        %v983 = vpack.c.b16 %v849, %v847
        %v984 = vpack.c.b16 %v852, %v850
        %v985 = vpack.c.b16 %v853, %v851
        %v986 = vpack.c.b16 %v856, %v854
        %v987 = vpack.c.b16 %v857, %v855
        %v988 = vpack.c.b16 %v860, %v858
        %v989 = vpack.c.b16 %v861, %v859
        %v990 = vpack.c.b16 %v864, %v862
        %v991 = vpack.c.b16 %v865, %v863
        %v992 = vpack.c.b16 %v868, %v866
        %v993 = vpack.c.b16 %v869, %v867
        %v994 = vpack.c.b16 %v872, %v870
        %v995 = vpack.c.b16 %v873, %v871
        %v996 = vpack.c.b16 %v876, %v874
        %v997 = vpack.c.b16 %v877, %v875
        %v998 = vpack.c.b16 %v880, %v878
        %v999 = vpack.c.b16 %v881, %v879
        %v1000 = vpack.c.b16 %v884, %v882
        %v1001 = vpack.c.b16 %v885, %v883
        %v1002 = vpack.c.b16 %v888, %v886
        %v1003 = vpack.c.b16 %v889, %v887
        %v1004 = vpack.c.b16 %v892, %v890
        %v1005 = vpack.c.b16 %v893, %v891
        %v1006 = vpack.c.b16 %v896, %v894
        %v1007 = vpack.c.b16 %v897, %v895
        %v1008 = vpack.c.b16 %v900, %v898
        %v1009 = vpack.c.b16 %v901, %v899
        %v1010 = vpack.c.b16 %v904, %v902
        %v1011 = vpack.c.b16 %v905, %v903
        %v1012 = vpack.c.b16 %v908, %v906
        %v1013 = vpack.c.b16 %v909, %v907
        %v1014 = vpack.c.b16 %v912, %v910
        %v1015 = vpack.c.b16 %v913, %v911
        %v1016 = vpack.c.b16 %v916, %v914
        %v1017 = vpack.c.b16 %v917, %v915
        %v1018 = vpack.c.b16 %v920, %v918
        %v1019 = vpack.c.b16 %v921, %v919
        %vm1118 = vcmask 130048
        %v1120 = vsel %vm1118, %v510, 0
        %v1123 = vsel %vm1118, %v517, 0
        %1125 = vmatprep.subr.bf16.mxu0 %v937
        %1126 = vmatpush1.bf16.msra.mxu0 %v936
        %1127 = vmatprep.subr.bf16.mxu0 %v935
        %1128 = vmatpush1.bf16.msra.mxu0 %v934
        %1129 = vmatprep.subr.bf16.mxu0 %v933
        %1130 = vmatpush1.bf16.msra.mxu0 %v932
        %1131 = vmatprep.subr.bf16.mxu0 %v931
        %1132 = vmatpush1.bf16.msra.mxu0 %v930
        %1133 = vmatprep.subr.bf16.mxu0 %v929
        %1134 = vmatpush1.bf16.msra.mxu0 %v928
        %1135 = vmatprep.subr.bf16.mxu0 %v927
        %1136 = vmatpush1.bf16.msra.mxu0 %v926
        %1137 = vmatprep.subr.bf16.mxu0 %v925
        %1138 = vmatpush1.bf16.msra.mxu0 %v924
        %1139 = vmatprep.subr.bf16.mxu0 %v923
        %1140 = vmatpush1.bf16.msra.mxu0 %v922
        %1141 = vmatprep.subr.bf16.mxu0 %v953
        %1142 = vmatpush2.bf16.msra.mxu0 %v952
        %1143 = vmatprep.subr.bf16.mxu0 %v951
        %1144 = vmatpush2.bf16.msra.mxu0 %v950
        %1145 = vmatprep.subr.bf16.mxu0 %v949
        %1146 = vmatpush2.bf16.msra.mxu0 %v948
        %1147 = vmatprep.subr.bf16.mxu0 %v947
        %1148 = vmatpush2.bf16.msra.mxu0 %v946
        %1149 = vmatprep.subr.bf16.mxu0 %v945
        %1150 = vmatpush2.bf16.msra.mxu0 %v944
        %1151 = vmatprep.subr.bf16.mxu0 %v943
        %1152 = vmatpush2.bf16.msra.mxu0 %v942
        %1153 = vmatprep.subr.bf16.mxu0 %v941
        %1154 = vmatpush2.bf16.msra.mxu0 %v940
        %1155 = vmatprep.subr.bf16.mxu0 %v939
        %1156 = vmatpush2.bf16.msra.mxu0 %v938
        %1157 = vmatprep.mubr.bf16.mxu0 %v505
        %1158 = vmatmul.mubr.bf16.gmra.mxu0 %v504
        %v1159 = vpop.f32.mrf.mxu0
        %v1160 = vadd.f32 %v621, %v1159
        %v1161 = vpop.f32.mrf.mxu0
        %v1162 = vadd.f32 %v625, %v1161
        %v1163 = vpop.f32.mrf.mxu0
        %v1164 = vadd.f32 %v621, %v1163
        %v1165 = vpop.f32.mrf.mxu0
        %v1166 = vadd.f32 %v625, %v1165
        %1167 = vmatprep.mubr.bf16.mxu0 %v512
        %1168 = vmatmul.mubr.bf16.gmra.mxu0 %v511
        %v1169 = vpop.f32.mrf.mxu0
        %v1170 = vadd.f32 %v621, %v1169
        %v1171 = vpop.f32.mrf.mxu0
        %v1172 = vadd.f32 %v625, %v1171
        %v1173 = vpop.f32.mrf.mxu0
        %v1174 = vadd.f32 %v621, %v1173
        %v1175 = vpop.f32.mrf.mxu0
        %v1176 = vadd.f32 %v625, %v1175
        %1177 = vdwg.mxu0
        %1178 = vmatprep.subr.bf16.mxu0 %v969
        %1179 = vmatpush1.bf16.msra.mxu0 %v968
        %1180 = vmatprep.subr.bf16.mxu0 %v967
        %1181 = vmatpush1.bf16.msra.mxu0 %v966
        %1182 = vmatprep.subr.bf16.mxu0 %v965
        %1183 = vmatpush1.bf16.msra.mxu0 %v964
        %1184 = vmatprep.subr.bf16.mxu0 %v963
        %1185 = vmatpush1.bf16.msra.mxu0 %v962
        %1186 = vmatprep.subr.bf16.mxu0 %v961
        %1187 = vmatpush1.bf16.msra.mxu0 %v960
        %1188 = vmatprep.subr.bf16.mxu0 %v959
        %1189 = vmatpush1.bf16.msra.mxu0 %v958
        %1190 = vmatprep.subr.bf16.mxu0 %v957
        %1191 = vmatpush1.bf16.msra.mxu0 %v956
        %1192 = vmatprep.subr.bf16.mxu0 %v955
        %1193 = vmatpush1.bf16.msra.mxu0 %v954
        %1194 = vmatprep.subr.bf16.mxu0 %v985
        %1195 = vmatpush2.bf16.msra.mxu0 %v984
        %1196 = vmatprep.subr.bf16.mxu0 %v983
        %1197 = vmatpush2.bf16.msra.mxu0 %v982
        %1198 = vmatprep.subr.bf16.mxu0 %v981
        %1199 = vmatpush2.bf16.msra.mxu0 %v980
        %1200 = vmatprep.subr.bf16.mxu0 %v979
        %1201 = vmatpush2.bf16.msra.mxu0 %v978
        %1202 = vmatprep.subr.bf16.mxu0 %v977
        %1203 = vmatpush2.bf16.msra.mxu0 %v976
        %1204 = vmatprep.subr.bf16.mxu0 %v975
        %1205 = vmatpush2.bf16.msra.mxu0 %v974
        %1206 = vmatprep.subr.bf16.mxu0 %v973
        %1207 = vmatpush2.bf16.msra.mxu0 %v972
        %1208 = vmatprep.subr.bf16.mxu0 %v971
        %1209 = vmatpush2.bf16.msra.mxu0 %v970
        %1210 = vmatprep.mubr.bf16.mxu0 %v507
        %1211 = vmatmul.mubr.bf16.gmra.mxu0 %v506
        %v1212 = vpop.f32.mrf.mxu0
        %v1213 = vadd.f32 %v1160, %v1212
        %v1214 = vpop.f32.mrf.mxu0
        %v1215 = vadd.f32 %v1162, %v1214
        %v1216 = vpop.f32.mrf.mxu0
        %v1217 = vadd.f32 %v1164, %v1216
        %v1218 = vpop.f32.mrf.mxu0
        %v1219 = vadd.f32 %v1166, %v1218
        %1220 = vmatprep.mubr.bf16.mxu0 %v514
        %1221 = vmatmul.mubr.bf16.gmra.mxu0 %v513
        %v1222 = vpop.f32.mrf.mxu0
        %v1223 = vadd.f32 %v1170, %v1222
        %v1224 = vpop.f32.mrf.mxu0
        %v1225 = vadd.f32 %v1172, %v1224
        %v1226 = vpop.f32.mrf.mxu0
        %v1227 = vadd.f32 %v1174, %v1226
        %v1228 = vpop.f32.mrf.mxu0
        %v1229 = vadd.f32 %v1176, %v1228
        %1230 = vdwg.mxu0
        %1231 = vmatprep.subr.bf16.mxu0 %v1001
        %1232 = vmatpush1.bf16.msra.mxu0 %v1000
        %1233 = vmatprep.subr.bf16.mxu0 %v999
        %1234 = vmatpush1.bf16.msra.mxu0 %v998
        %1235 = vmatprep.subr.bf16.mxu0 %v997
        %1236 = vmatpush1.bf16.msra.mxu0 %v996
        %1237 = vmatprep.subr.bf16.mxu0 %v995
        %1238 = vmatpush1.bf16.msra.mxu0 %v994
        %1239 = vmatprep.subr.bf16.mxu0 %v993
        %1240 = vmatpush1.bf16.msra.mxu0 %v992
        %1241 = vmatprep.subr.bf16.mxu0 %v991
        %1242 = vmatpush1.bf16.msra.mxu0 %v990
        %1243 = vmatprep.subr.bf16.mxu0 %v989
        %1244 = vmatpush1.bf16.msra.mxu0 %v988
        %1245 = vmatprep.subr.bf16.mxu0 %v987
        %1246 = vmatpush1.bf16.msra.mxu0 %v986
        %1247 = vmatprep.subr.bf16.mxu0 %v1017
        %1248 = vmatpush2.bf16.msra.mxu0 %v1016
        %1249 = vmatprep.subr.bf16.mxu0 %v1015
        %1250 = vmatpush2.bf16.msra.mxu0 %v1014
        %1251 = vmatprep.subr.bf16.mxu0 %v1013
        %1252 = vmatpush2.bf16.msra.mxu0 %v1012
        %1253 = vmatprep.subr.bf16.mxu0 %v1011
        %1254 = vmatpush2.bf16.msra.mxu0 %v1010
        %1255 = vmatprep.subr.bf16.mxu0 %v1009
        %1256 = vmatpush2.bf16.msra.mxu0 %v1008
        %1257 = vmatprep.subr.bf16.mxu0 %v1007
        %1258 = vmatpush2.bf16.msra.mxu0 %v1006
        %1259 = vmatprep.subr.bf16.mxu0 %v1005
        %1260 = vmatpush2.bf16.msra.mxu0 %v1004
        %1261 = vmatprep.subr.bf16.mxu0 %v1003
        %1262 = vmatpush2.bf16.msra.mxu0 %v1002
        %1263 = vmatprep.mubr.bf16.mxu0 %v509
        %1264 = vmatmul.mubr.bf16.gmra.mxu0 %v508
        %v1265 = vpop.f32.mrf.mxu0
        %v1266 = vadd.f32 %v1213, %v1265
        %v1267 = vpop.f32.mrf.mxu0
        %v1268 = vadd.f32 %v1215, %v1267
        %v1269 = vpop.f32.mrf.mxu0
        %v1270 = vadd.f32 %v1217, %v1269
        %v1271 = vpop.f32.mrf.mxu0
        %v1272 = vadd.f32 %v1219, %v1271
        %1273 = vmatprep.mubr.bf16.mxu0 %v516
        %1274 = vmatmul.mubr.bf16.gmra.mxu0 %v515
        %v1275 = vpop.f32.mrf.mxu0
        %v1276 = vadd.f32 %v1223, %v1275
        %v1277 = vpop.f32.mrf.mxu0
        %v1278 = vadd.f32 %v1225, %v1277
        %v1279 = vpop.f32.mrf.mxu0
        %v1280 = vadd.f32 %v1227, %v1279
        %v1281 = vpop.f32.mrf.mxu0
        %v1282 = vadd.f32 %v1229, %v1281
        %1283 = vdwg.mxu0
        %1284 = vmatprep.subr.bf16.mxu0 0
        %1285 = vmatpush1.bf16.msra.mxu0 0
        %1286 = vmatprep.subr.bf16.mxu0 0
        %1287 = vmatpush1.bf16.msra.mxu0 0
        %1288 = vmatprep.subr.bf16.mxu0 0
        %1289 = vmatpush1.bf16.msra.mxu0 0
        %1290 = vmatprep.subr.bf16.mxu0 0
        %1291 = vmatpush1.bf16.msra.mxu0 0
        %1292 = vmatprep.subr.bf16.mxu0 0
        %1293 = vmatpush1.bf16.msra.mxu0 0
        %1294 = vmatprep.subr.bf16.mxu0 0
        %1295 = vmatpush1.bf16.msra.mxu0 0
        %1296 = vmatprep.subr.bf16.mxu0 0
        %1297 = vmatpush1.bf16.msra.mxu0 0
        %1298 = vmatprep.subr.bf16.mxu0 %v1019
        %1299 = vmatpush1.bf16.msra.mxu0 %v1018
        %1300 = vmatprep.subr.bf16.mxu0 0
        %1301 = vmatpush2.bf16.msra.mxu0 0
        %1302 = vmatprep.subr.bf16.mxu0 0
        %1303 = vmatpush2.bf16.msra.mxu0 0
        %1304 = vmatprep.subr.bf16.mxu0 0
        %1305 = vmatpush2.bf16.msra.mxu0 0
        %1306 = vmatprep.subr.bf16.mxu0 0
        %1307 = vmatpush2.bf16.msra.mxu0 0
        %1308 = vmatprep.subr.bf16.mxu0 0
        %1309 = vmatpush2.bf16.msra.mxu0 0
        %1310 = vmatprep.subr.bf16.mxu0 0
        %1311 = vmatpush2.bf16.msra.mxu0 0
        %1312 = vmatprep.subr.bf16.mxu0 0
        %1313 = vmatpush2.bf16.msra.mxu0 0
        %1314 = vmatprep.subr.bf16.mxu0 0
        %1315 = vmatpush2.bf16.msra.mxu0 0
        %1316 = vmatprep.mubr.bf16.mxu0 0
        %1317 = vmatmul.mubr.bf16.gmra.mxu0 %v1120
        %v1318 = vpop.f32.mrf.mxu0
        %v1319 = vadd.f32 %v1266, %v1318
        %v1320 = vpop.f32.mrf.mxu0
        %v1321 = vadd.f32 %v1268, %v1320
        %v1322 = vpop.f32.mrf.mxu0
        %v1323 = vadd.f32 %v1270, %v1322
        %v1324 = vpop.f32.mrf.mxu0
        %v1325 = vadd.f32 %v1272, %v1324
        %1326 = vmatprep.mubr.bf16.mxu0 0
        %1327 = vmatmul.mubr.bf16.gmra.mxu0 %v1123
        %v1328 = vpop.f32.mrf.mxu0
        %v1329 = vadd.f32 %v1276, %v1328
        %v1330 = vpop.f32.mrf.mxu0
        %v1331 = vadd.f32 %v1278, %v1330
        %v1332 = vpop.f32.mrf.mxu0
        %v1333 = vadd.f32 %v1280, %v1332
        %v1334 = vpop.f32.mrf.mxu0
        %v1335 = vadd.f32 %v1282, %v1334
        %1336 = vdwg.mxu0
        %v1337 = vmax.f32 %v1319, 0.0
        %v1338 = vmax.f32 %v1321, 0.0
        %v1339 = vmax.f32 %v1323, 0.0
        %v1340 = vmax.f32 %v1325, 0.0
        %v1341 = vmax.f32 %v1329, 0.0
        %v1342 = vmax.f32 %v1331, 0.0
        %v1343 = vmax.f32 %v1333, 0.0
        %v1344 = vmax.f32 %v1335, 0.0
        %v1345 = vpack.c.bf16 %v1339, %v1337
        %v1346 = vpack.c.bf16 %v1340, %v1338
        %v1347 = vpack.c.bf16 %v1343, %v1341
        %v1348 = vpack.c.bf16 %v1344, %v1342
        %v1349 = vld [vmem:[%s3] sm:$0xf]
        %v1350 = vld [vmem:[%s3 + $0x4] sm:$0xf]
        %v1351 = vld [vmem:[%s3 + $0x8] sm:$0xf]
        %v1352 = vld [vmem:[%s3 + $0xc] sm:$0xf]
        %v1353 = vld [vmem:[%s3 + $0x10] sm:$0xf]
        %v1354 = vld [vmem:[%s3 + $0x14] sm:$0xf]
        %v1355 = vld [vmem:[%s3 + $0x18] sm:$0xf]
        %v1356 = vld [vmem:[%s3 + $0x1c] sm:$0xf]
        %v1357 = vld [vmem:[%s3 + $0x20] sm:$0xf]
        %v1358 = vld [vmem:[%s3 + $0x24] sm:$0xf]
        %v1359 = vld [vmem:[%s3 + $0x28] sm:$0xf]
        %v1360 = vld [vmem:[%s3 + $0x2c] sm:$0xf]
        %v1361 = vld [vmem:[%s3 + $0x30] sm:$0xf]
        %v1362 = vld [vmem:[%s3 + $0x34] sm:$0xf]
        %v1363 = vld [vmem:[%s3 + $0x38] sm:$0xf]
        %v1364 = vld [vmem:[%s3 + $0x3c] sm:$0xf]
        %v1365 = vld [vmem:[%s3 + $0x40] sm:$0xf]
        %v1366 = vld [vmem:[%s3 + $0x44] sm:$0xf]
        %v1367 = vld [vmem:[%s3 + $0x48] sm:$0xf]
        %v1368 = vld [vmem:[%s3 + $0x4c] sm:$0xf]
        %v1369 = vld [vmem:[%s3 + $0x50] sm:$0xf]
        %v1370 = vld [vmem:[%s3 + $0x54] sm:$0xf]
        %v1371 = vld [vmem:[%s3 + $0x58] sm:$0xf]
        %v1372 = vld [vmem:[%s3 + $0x5c] sm:$0xf]
        %v1373 = vld [vmem:[%s3 + $0x60] sm:$0xf]
        %v1374 = vld [vmem:[%s3 + $0x64] sm:$0xf]
        %v1375 = vld [vmem:[%s3 + $0x68] sm:$0xf]
        %v1376 = vld [vmem:[%s3 + $0x6c] sm:$0xf]
        %v1377 = vld [vmem:[%s3 + $0x70] sm:$0xf]
        %v1378 = vld [vmem:[%s3 + $0x74] sm:$0xf]
        %v1379 = vld [vmem:[%s3 + $0x78] sm:$0xf]
        %v1380 = vld [vmem:[%s3 + $0x7c] sm:$0xf]
        %v1381 = vld [vmem:[%s4] sm:$0x1]
        %v1383 = vlaneseq
        %v1384 = vshrl.u32 %v1383, 7
        %v1385 = vsub.s32 0, %v1384
        %v1386 = vrot.slane %v1381, %v1385
        %v1420 = vunpack.c.l.b16 %v1349
        %v1421 = vunpack.c.l.b16 %v1350
        %v1422 = vunpack.c.l.b16 %v1351
        %v1423 = vunpack.c.l.b16 %v1352
        %v1424 = vunpack.c.l.b16 %v1353
        %v1425 = vunpack.c.l.b16 %v1354
        %v1426 = vunpack.c.l.b16 %v1355
        %v1427 = vunpack.c.l.b16 %v1356
        %v1428 = vunpack.c.l.b16 %v1357
        %v1429 = vunpack.c.l.b16 %v1358
        %v1430 = vunpack.c.l.b16 %v1359
        %v1431 = vunpack.c.l.b16 %v1360
        %v1432 = vunpack.c.l.b16 %v1361
        %v1433 = vunpack.c.l.b16 %v1362
        %v1434 = vunpack.c.l.b16 %v1363
        %v1435 = vunpack.c.l.b16 %v1364
        %v1436 = vunpack.c.l.b16 %v1365
        %v1437 = vunpack.c.l.b16 %v1366
        %v1438 = vunpack.c.l.b16 %v1367
        %v1439 = vunpack.c.l.b16 %v1368
        %v1440 = vunpack.c.l.b16 %v1369
        %v1441 = vunpack.c.l.b16 %v1370
        %v1442 = vunpack.c.l.b16 %v1371
        %v1443 = vunpack.c.l.b16 %v1372
        %v1444 = vunpack.c.l.b16 %v1373
        %v1445 = vunpack.c.l.b16 %v1374
        %v1446 = vunpack.c.l.b16 %v1375
        %v1447 = vunpack.c.l.b16 %v1376
        %v1448 = vunpack.c.l.b16 %v1377
        %v1449 = vunpack.c.l.b16 %v1378
        %v1450 = vunpack.c.l.b16 %v1379
        %v1451 = vunpack.c.l.b16 %v1380
        %v1452 = vpack.c.b16 %v1421, %v1420
        %v1453 = vpack.c.b16 %v1423, %v1422
        %v1454 = vpack.c.b16 %v1425, %v1424
        %v1455 = vpack.c.b16 %v1427, %v1426
        %v1456 = vpack.c.b16 %v1429, %v1428
        %v1457 = vpack.c.b16 %v1431, %v1430
        %v1458 = vpack.c.b16 %v1433, %v1432
        %v1459 = vpack.c.b16 %v1435, %v1434
        %v1460 = vpack.c.b16 %v1437, %v1436
        %v1461 = vpack.c.b16 %v1439, %v1438
        %v1462 = vpack.c.b16 %v1441, %v1440
        %v1463 = vpack.c.b16 %v1443, %v1442
        %v1464 = vpack.c.b16 %v1445, %v1444
        %v1465 = vpack.c.b16 %v1447, %v1446
        %v1466 = vpack.c.b16 %v1449, %v1448
        %v1467 = vpack.c.b16 %v1451, %v1450
        %1484 = vmatprep.subr.bf16.mxu0 0
        %1485 = vmatpush1.bf16.msra.mxu0 %v1459
        %1486 = vmatprep.subr.bf16.mxu0 0
        %1487 = vmatpush1.bf16.msra.mxu0 %v1458
        %1488 = vmatprep.subr.bf16.mxu0 0
        %1489 = vmatpush1.bf16.msra.mxu0 %v1457
        %1490 = vmatprep.subr.bf16.mxu0 0
        %1491 = vmatpush1.bf16.msra.mxu0 %v1456
        %1492 = vmatprep.subr.bf16.mxu0 0
        %1493 = vmatpush1.bf16.msra.mxu0 %v1455
        %1494 = vmatprep.subr.bf16.mxu0 0
        %1495 = vmatpush1.bf16.msra.mxu0 %v1454
        %1496 = vmatprep.subr.bf16.mxu0 0
        %1497 = vmatpush1.bf16.msra.mxu0 %v1453
        %1498 = vmatprep.subr.bf16.mxu0 0
        %1499 = vmatpush1.bf16.msra.mxu0 %v1452
        %1500 = vmatprep.subr.bf16.mxu0 0
        %1501 = vmatpush2.bf16.msra.mxu0 %v1467
        %1502 = vmatprep.subr.bf16.mxu0 0
        %1503 = vmatpush2.bf16.msra.mxu0 %v1466
        %1504 = vmatprep.subr.bf16.mxu0 0
        %1505 = vmatpush2.bf16.msra.mxu0 %v1465
        %1506 = vmatprep.subr.bf16.mxu0 0
        %1507 = vmatpush2.bf16.msra.mxu0 %v1464
        %1508 = vmatprep.subr.bf16.mxu0 0
        %1509 = vmatpush2.bf16.msra.mxu0 %v1463
        %1510 = vmatprep.subr.bf16.mxu0 0
        %1511 = vmatpush2.bf16.msra.mxu0 %v1462
        %1512 = vmatprep.subr.bf16.mxu0 0
        %1513 = vmatpush2.bf16.msra.mxu0 %v1461
        %1514 = vmatprep.subr.bf16.mxu0 0
        %1515 = vmatpush2.bf16.msra.mxu0 %v1460
        %1516 = vmatprep.mubr.bf16.mxu0 %v1346
        %1517 = vmatmul.mubr.bf16.gmra.mxu0 %v1345
        %v1518 = vpop.f32.mrf.mxu0
        %v1519 = vadd.f32 %v1386, %v1518
        %v1520 = vpop.f32.mrf.mxu0
        %v1521 = vpop.f32.mrf.mxu0
        %v1522 = vadd.f32 %v1386, %v1521
        %v1523 = vpop.f32.mrf.mxu0
        %1524 = vmatprep.mubr.bf16.mxu0 %v1348
        %1525 = vmatmul.mubr.bf16.gmra.mxu0 %v1347
        %v1526 = vpop.f32.mrf.mxu0
        %v1527 = vadd.f32 %v1386, %v1526
        %v1528 = vpop.f32.mrf.mxu0
        %v1529 = vpop.f32.mrf.mxu0
        %v1530 = vadd.f32 %v1386, %v1529
        %v1531 = vpop.f32.mrf.mxu0
        %1532 = vdwg.mxu0
        %v1533 = vmax.f32 %v1519, 0.0
        %v1534 = vmax.f32 %v1522, 0.0
        %v1535 = vmax.f32 %v1527, 0.0
        %v1536 = vmax.f32 %v1530, 0.0
        %v1537 = vpack.c.bf16 %v1534, %v1533
        %v1538 = vpack.c.bf16 %v1536, %v1535
        %v1539 = vld [vmem:[%s5] sm:$0xf]
        %v1540 = vld [vmem:[%s5 + $0x4] sm:$0xf]
        %v1541 = vld [vmem:[%s5 + $0x8] sm:$0xf]
        %v1542 = vld [vmem:[%s5 + $0xc] sm:$0xf]
        %v1543 = vld [vmem:[%s5 + $0x10] sm:$0xf]
        %v1544 = vld [vmem:[%s5 + $0x14] sm:$0xf]
        %v1545 = vld [vmem:[%s5 + $0x18] sm:$0xf]
        %v1546 = vld [vmem:[%s5 + $0x1c] sm:$0xf]
        %v1547 = vld [vmem:[%s5 + $0x20] sm:$0xf]
        %v1548 = vld [vmem:[%s5 + $0x24] sm:$0xf]
        %v1549 = vld [vmem:[%s5 + $0x28] sm:$0xf]
        %v1550 = vld [vmem:[%s5 + $0x2c] sm:$0xf]
        %v1551 = vld [vmem:[%s5 + $0x30] sm:$0xf]
        %v1552 = vld [vmem:[%s5 + $0x34] sm:$0xf]
        %v1553 = vld [vmem:[%s5 + $0x38] sm:$0xf]
        %v1554 = vld [vmem:[%s5 + $0x3c] sm:$0xf]
        %v1555 = vld [vmem:[%s6] sm:$0x1]
        %v1557 = vlaneseq
        %v1558 = vshrl.u32 %v1557, 7
        %v1559 = vsub.s32 0, %v1558
        %v1560 = vrot.slane %v1555, %v1559
        %v1578 = vunpack.c.l.b16 %v1539
        %v1579 = vunpack.c.l.b16 %v1540
        %v1580 = vunpack.c.l.b16 %v1541
        %v1581 = vunpack.c.l.b16 %v1542
        %v1582 = vunpack.c.l.b16 %v1543
        %v1583 = vunpack.c.l.b16 %v1544
        %v1584 = vunpack.c.l.b16 %v1545
        %v1585 = vunpack.c.l.b16 %v1546
        %v1586 = vunpack.c.l.b16 %v1547
        %v1587 = vunpack.c.l.b16 %v1548
        %v1588 = vunpack.c.l.b16 %v1549
        %v1589 = vunpack.c.l.b16 %v1550
        %v1590 = vunpack.c.l.b16 %v1551
        %v1591 = vunpack.c.l.b16 %v1552
        %v1592 = vunpack.c.l.b16 %v1553
        %v1593 = vunpack.c.l.b16 %v1554
        %v1594 = vpack.c.b16 %v1579, %v1578
        %v1595 = vpack.c.b16 %v1581, %v1580
        %v1596 = vpack.c.b16 %v1583, %v1582
        %v1597 = vpack.c.b16 %v1585, %v1584
        %v1598 = vpack.c.b16 %v1587, %v1586
        %v1599 = vpack.c.b16 %v1589, %v1588
        %v1600 = vpack.c.b16 %v1591, %v1590
        %v1601 = vpack.c.b16 %v1593, %v1592
        %1610 = vmatprep.subr.bf16.mxu0 0
        %1611 = vmatpush1.bf16.msra.mxu0 %v1601
        %1612 = vmatprep.subr.bf16.mxu0 0
        %1613 = vmatpush1.bf16.msra.mxu0 %v1600
        %1614 = vmatprep.subr.bf16.mxu0 0
        %1615 = vmatpush1.bf16.msra.mxu0 %v1599
        %1616 = vmatprep.subr.bf16.mxu0 0
        %1617 = vmatpush1.bf16.msra.mxu0 %v1598
        %1618 = vmatprep.subr.bf16.mxu0 0
        %1619 = vmatpush1.bf16.msra.mxu0 %v1597
        %1620 = vmatprep.subr.bf16.mxu0 0
        %1621 = vmatpush1.bf16.msra.mxu0 %v1596
        %1622 = vmatprep.subr.bf16.mxu0 0
        %1623 = vmatpush1.bf16.msra.mxu0 %v1595
        %1624 = vmatprep.subr.bf16.mxu0 0
        %1625 = vmatpush1.bf16.msra.mxu0 %v1594
        %1626 = vmatprep.subr.bf16.mxu0 0
        %1627 = vmatpush2.bf16.msra.mxu0 0
        %1628 = vmatprep.subr.bf16.mxu0 0
        %1629 = vmatpush2.bf16.msra.mxu0 0
        %1630 = vmatprep.subr.bf16.mxu0 0
        %1631 = vmatpush2.bf16.msra.mxu0 0
        %1632 = vmatprep.subr.bf16.mxu0 0
        %1633 = vmatpush2.bf16.msra.mxu0 0
        %1634 = vmatprep.subr.bf16.mxu0 0
        %1635 = vmatpush2.bf16.msra.mxu0 0
        %1636 = vmatprep.subr.bf16.mxu0 0
        %1637 = vmatpush2.bf16.msra.mxu0 0
        %1638 = vmatprep.subr.bf16.mxu0 0
        %1639 = vmatpush2.bf16.msra.mxu0 0
        %1640 = vmatprep.subr.bf16.mxu0 0
        %1641 = vmatpush2.bf16.msra.mxu0 0
        %1642 = vmatprep.mubr.bf16.mxu0 0
        %1643 = vmatmul.mubr.bf16.gmra.mxu0 %v1537
        %v1644 = vpop.f32.mrf.mxu0
        %v1645 = vadd.f32 %v1560, %v1644
        %v1646 = vpop.f32.mrf.mxu0
        %v1647 = vpop.f32.mrf.mxu0
        %v1648 = vadd.f32 %v1560, %v1647
        %v1649 = vpop.f32.mrf.mxu0
        %1650 = vmatprep.mubr.bf16.mxu0 0
        %1651 = vmatmul.mubr.bf16.gmra.mxu0 %v1538
        %v1652 = vpop.f32.mrf.mxu0
        %v1653 = vadd.f32 %v1560, %v1652
        %v1654 = vpop.f32.mrf.mxu0
        %v1655 = vpop.f32.mrf.mxu0
        %v1656 = vadd.f32 %v1560, %v1655
        %v1657 = vpop.f32.mrf.mxu0
        %1658 = vdwg.mxu0
        %v1659 = vmax.f32 %v1645, 0.0
        %v1660 = vmax.f32 %v1648, 0.0
        %v1661 = vmax.f32 %v1653, 0.0
        %v1662 = vmax.f32 %v1656, 0.0
        %v1663 = vpack.c.bf16 %v1660, %v1659
        %v1664 = vpack.c.bf16 %v1662, %v1661
        %v1665 = vld [vmem:[%s7] sm:$0xf]
        %v1666 = vld [vmem:[%s7 + $0x4] sm:$0xf]
        %v1667 = vld [vmem:[%s7 + $0x8] sm:$0xf]
        %v1668 = vld [vmem:[%s7 + $0xc] sm:$0xf]
        %v1669 = vld [vmem:[%s7 + $0x10] sm:$0xf]
        %v1670 = vld [vmem:[%s7 + $0x14] sm:$0xf]
        %v1671 = vld [vmem:[%s7 + $0x18] sm:$0xf]
        %v1672 = vld [vmem:[%s7 + $0x1c] sm:$0xf]
        %v1673 = vld [vmem:[%s8] sm:$0x1]
        %v1675 = vlaneseq
        %v1676 = vshrl.u32 %v1675, 7
        %v1677 = vsub.s32 0, %v1676
        %v1678 = vrot.slane %v1673, %v1677
        %v1688 = vunpack.c.l.b16 %v1665
        %v1689 = vunpack.c.l.b16 %v1666
        %v1690 = vunpack.c.l.b16 %v1667
        %v1691 = vunpack.c.l.b16 %v1668
        %v1692 = vunpack.c.l.b16 %v1669
        %v1693 = vunpack.c.l.b16 %v1670
        %v1694 = vunpack.c.l.b16 %v1671
        %v1695 = vunpack.c.l.b16 %v1672
        %v1696 = vpack.c.b16 %v1689, %v1688
        %v1697 = vpack.c.b16 %v1691, %v1690
        %v1698 = vpack.c.b16 %v1693, %v1692
        %v1699 = vpack.c.b16 %v1695, %v1694
        %vm1704 = vcmask 523264
        %v1706 = vsel %vm1704, %v1663, 0
        %v1709 = vsel %vm1704, %v1664, 0
        %1711 = vmatprep.subr.bf16.mxu0 0
        %1712 = vmatpush1.bf16.msra.mxu0 0
        %1713 = vmatprep.subr.bf16.mxu0 0
        %1714 = vmatpush1.bf16.msra.mxu0 0
        %1715 = vmatprep.subr.bf16.mxu0 0
        %1716 = vmatpush1.bf16.msra.mxu0 0
        %1717 = vmatprep.subr.bf16.mxu0 0
        %1718 = vmatpush1.bf16.msra.mxu0 0
        %1719 = vmatprep.subr.bf16.mxu0 0
        %1720 = vmatpush1.bf16.msra.mxu0 %v1699
        %1721 = vmatprep.subr.bf16.mxu0 0
        %1722 = vmatpush1.bf16.msra.mxu0 %v1698
        %1723 = vmatprep.subr.bf16.mxu0 0
        %1724 = vmatpush1.bf16.msra.mxu0 %v1697
        %1725 = vmatprep.subr.bf16.mxu0 0
        %1726 = vmatpush1.bf16.msra.mxu0 %v1696
        %1727 = vmatprep.subr.bf16.mxu0 0
        %1728 = vmatpush2.bf16.msra.mxu0 0
        %1729 = vmatprep.subr.bf16.mxu0 0
        %1730 = vmatpush2.bf16.msra.mxu0 0
        %1731 = vmatprep.subr.bf16.mxu0 0
        %1732 = vmatpush2.bf16.msra.mxu0 0
        %1733 = vmatprep.subr.bf16.mxu0 0
        %1734 = vmatpush2.bf16.msra.mxu0 0
        %1735 = vmatprep.subr.bf16.mxu0 0
        %1736 = vmatpush2.bf16.msra.mxu0 0
        %1737 = vmatprep.subr.bf16.mxu0 0
        %1738 = vmatpush2.bf16.msra.mxu0 0
        %1739 = vmatprep.subr.bf16.mxu0 0
        %1740 = vmatpush2.bf16.msra.mxu0 0
        %1741 = vmatprep.subr.bf16.mxu0 0
        %1742 = vmatpush2.bf16.msra.mxu0 0
        %1743 = vmatprep.mubr.bf16.mxu0 0
        %1744 = vmatmul.mubr.bf16.gmra.mxu0 %v1706
        %v1745 = vpop.f32.mrf.mxu0
        %v1746 = vadd.f32 %v1678, %v1745
        %v1747 = vpop.f32.mrf.mxu0
        %v1748 = vpop.f32.mrf.mxu0
        %v1749 = vadd.f32 %v1678, %v1748
        %v1750 = vpop.f32.mrf.mxu0
        %1751 = vmatprep.mubr.bf16.mxu0 0
        %1752 = vmatmul.mubr.bf16.gmra.mxu0 %v1709
        %v1753 = vpop.f32.mrf.mxu0
        %v1754 = vadd.f32 %v1678, %v1753
        %v1755 = vpop.f32.mrf.mxu0
        %v1756 = vpop.f32.mrf.mxu0
        %v1757 = vadd.f32 %v1678, %v1756
        %v1758 = vpop.f32.mrf.mxu0
        %1759 = vdwg.mxu0
        %v1760 = vmax.f32 %v1746, 0.0
        %v1761 = vmax.f32 %v1749, 0.0
        %v1762 = vmax.f32 %v1754, 0.0
        %v1763 = vmax.f32 %v1757, 0.0
        %v1764 = vpack.c.bf16 %v1761, %v1760
        %v1765 = vpack.c.bf16 %v1763, %v1762
        %v1766 = vld [vmem:[%s9] sm:$0xff]
        %v1767 = vld [vmem:[%s9 + $0x8] sm:$0xff]
        %v1768 = vld [vmem:[%s9 + $0x10] sm:$0xff]
        %v1769 = vld [vmem:[%s9 + $0x18] sm:$0xff]
        %v1770 = vld [vmem:[%s9 + $0x20] sm:$0xff]
        %v1771 = vld [vmem:[%s9 + $0x28] sm:$0xff]
        %v1772 = vld [vmem:[%s9 + $0x30] sm:$0xff]
        %v1773 = vld [vmem:[%s9 + $0x38] sm:$0xff]
        %v1774 = vld [vmem:[%s9 + $0x40] sm:$0xff]
        %v1775 = vld [vmem:[%s9 + $0x48] sm:$0xff]
        %v1776 = vld [vmem:[%s9 + $0x50] sm:$0xff]
        %v1777 = vld [vmem:[%s9 + $0x58] sm:$0xff]
        %v1778 = vld [vmem:[%s9 + $0x60] sm:$0xff]
        %v1779 = vld [vmem:[%s9 + $0x68] sm:$0xff]
        %v1780 = vld [vmem:[%s9 + $0x70] sm:$0xff]
        %v1781 = vld [vmem:[%s9 + $0x78] sm:$0xff]
        %v1782 = vld [vmem:[%s10] sm:$0x3]
        %v1784 = vlaneseq
        %v1785 = vshrl.u32 %v1784, 7
        %v1786 = vsub.s32 0, %v1785
        %v1787 = vrot.slane %v1782, %v1786
        %v1788 = vlaneseq
        %v1789 = vshrl.u32 %v1788, 7
        %v1790 = vsub.s32 1, %v1789
        %v1791 = vrot.slane %v1782, %v1790
        %v1810 = vunpack.c.l.b16 %v1766
        %v1811 = vunpack.c.h.b16 %v1766
        %v1812 = vunpack.c.l.b16 %v1767
        %v1813 = vunpack.c.h.b16 %v1767
        %v1814 = vunpack.c.l.b16 %v1768
        %v1815 = vunpack.c.h.b16 %v1768
        %v1816 = vunpack.c.l.b16 %v1769
        %v1817 = vunpack.c.h.b16 %v1769
        %v1818 = vunpack.c.l.b16 %v1770
        %v1819 = vunpack.c.h.b16 %v1770
        %v1820 = vunpack.c.l.b16 %v1771
        %v1821 = vunpack.c.h.b16 %v1771
        %v1822 = vunpack.c.l.b16 %v1772
        %v1823 = vunpack.c.h.b16 %v1772
        %v1824 = vunpack.c.l.b16 %v1773
        %v1825 = vunpack.c.h.b16 %v1773
        %v1826 = vunpack.c.l.b16 %v1774
        %v1827 = vunpack.c.h.b16 %v1774
        %v1828 = vunpack.c.l.b16 %v1775
        %v1829 = vunpack.c.h.b16 %v1775
        %v1830 = vunpack.c.l.b16 %v1776
        %v1831 = vunpack.c.h.b16 %v1776
        %v1832 = vunpack.c.l.b16 %v1777
        %v1833 = vunpack.c.h.b16 %v1777
        %v1834 = vunpack.c.l.b16 %v1778
        %v1835 = vunpack.c.h.b16 %v1778
        %v1836 = vunpack.c.l.b16 %v1779
        %v1837 = vunpack.c.h.b16 %v1779
        %v1838 = vunpack.c.l.b16 %v1780
        %v1839 = vunpack.c.h.b16 %v1780
        %v1840 = vunpack.c.l.b16 %v1781
        %v1841 = vunpack.c.h.b16 %v1781
        %v1842 = vpack.c.b16 %v1812, %v1810
        %v1843 = vpack.c.b16 %v1813, %v1811
        %v1844 = vpack.c.b16 %v1816, %v1814
        %v1845 = vpack.c.b16 %v1817, %v1815
        %v1846 = vpack.c.b16 %v1820, %v1818
        %v1847 = vpack.c.b16 %v1821, %v1819
        %v1848 = vpack.c.b16 %v1824, %v1822
        %v1849 = vpack.c.b16 %v1825, %v1823
        %v1850 = vpack.c.b16 %v1828, %v1826
        %v1851 = vpack.c.b16 %v1829, %v1827
        %v1852 = vpack.c.b16 %v1832, %v1830
        %v1853 = vpack.c.b16 %v1833, %v1831
        %v1854 = vpack.c.b16 %v1836, %v1834
        %v1855 = vpack.c.b16 %v1837, %v1835
        %v1856 = vpack.c.b16 %v1840, %v1838
        %v1857 = vpack.c.b16 %v1841, %v1839
        %1874 = vmatprep.subr.bf16.mxu0 %v1857
        %1875 = vmatpush1.bf16.msra.mxu0 %v1856
        %1876 = vmatprep.subr.bf16.mxu0 %v1855
        %1877 = vmatpush1.bf16.msra.mxu0 %v1854
        %1878 = vmatprep.subr.bf16.mxu0 %v1853
        %1879 = vmatpush1.bf16.msra.mxu0 %v1852
        %1880 = vmatprep.subr.bf16.mxu0 %v1851
        %1881 = vmatpush1.bf16.msra.mxu0 %v1850
        %1882 = vmatprep.subr.bf16.mxu0 %v1849
        %1883 = vmatpush1.bf16.msra.mxu0 %v1848
        %1884 = vmatprep.subr.bf16.mxu0 %v1847
        %1885 = vmatpush1.bf16.msra.mxu0 %v1846
        %1886 = vmatprep.subr.bf16.mxu0 %v1845
        %1887 = vmatpush1.bf16.msra.mxu0 %v1844
        %1888 = vmatprep.subr.bf16.mxu0 %v1843
        %1889 = vmatpush1.bf16.msra.mxu0 %v1842
        %1890 = vmatprep.subr.bf16.mxu0 0
        %1891 = vmatpush2.bf16.msra.mxu0 0
        %1892 = vmatprep.subr.bf16.mxu0 0
        %1893 = vmatpush2.bf16.msra.mxu0 0
        %1894 = vmatprep.subr.bf16.mxu0 0
        %1895 = vmatpush2.bf16.msra.mxu0 0
        %1896 = vmatprep.subr.bf16.mxu0 0
        %1897 = vmatpush2.bf16.msra.mxu0 0
        %1898 = vmatprep.subr.bf16.mxu0 0
        %1899 = vmatpush2.bf16.msra.mxu0 0
        %1900 = vmatprep.subr.bf16.mxu0 0
        %1901 = vmatpush2.bf16.msra.mxu0 0
        %1902 = vmatprep.subr.bf16.mxu0 0
        %1903 = vmatpush2.bf16.msra.mxu0 0
        %1904 = vmatprep.subr.bf16.mxu0 0
        %1905 = vmatpush2.bf16.msra.mxu0 0
        %1906 = vmatprep.mubr.bf16.mxu0 0
        %1907 = vmatmul.mubr.bf16.gmra.mxu0 %v1764
        %v1908 = vpop.f32.mrf.mxu0
        %v1909 = vadd.f32 %v1787, %v1908
        %v1910 = vpop.f32.mrf.mxu0
        %v1911 = vadd.f32 %v1791, %v1910
        %v1912 = vpop.f32.mrf.mxu0
        %v1913 = vadd.f32 %v1787, %v1912
        %v1914 = vpop.f32.mrf.mxu0
        %v1915 = vadd.f32 %v1791, %v1914
        %1916 = vmatprep.mubr.bf16.mxu0 0
        %1917 = vmatmul.mubr.bf16.gmra.mxu0 %v1765
        %v1918 = vpop.f32.mrf.mxu0
        %v1919 = vadd.f32 %v1787, %v1918
        %v1920 = vpop.f32.mrf.mxu0
        %v1921 = vadd.f32 %v1791, %v1920
        %v1922 = vpop.f32.mrf.mxu0
        %v1923 = vadd.f32 %v1787, %v1922
        %v1924 = vpop.f32.mrf.mxu0
        %v1925 = vadd.f32 %v1791, %v1924
        %1926 = vdwg.mxu0
        %v1927 = vmax.f32 %v1909, 0.0
        %v1928 = vmax.f32 %v1911, 0.0
        %v1929 = vmax.f32 %v1913, 0.0
        %v1930 = vmax.f32 %v1915, 0.0
        %v1931 = vmax.f32 %v1919, 0.0
        %v1932 = vmax.f32 %v1921, 0.0
        %v1933 = vmax.f32 %v1923, 0.0
        %v1934 = vmax.f32 %v1925, 0.0
        %v1935 = vpack.c.bf16 %v1929, %v1927
        %v1936 = vpack.c.bf16 %v1930, %v1928
        %v1937 = vpack.c.bf16 %v1933, %v1931
        %v1938 = vpack.c.bf16 %v1934, %v1932
        %v1939 = vld [vmem:[%s11] sm:$0xff]
        %v1940 = vld [vmem:[%s11 + $0x8] sm:$0xff]
        %v1941 = vld [vmem:[%s11 + $0x10] sm:$0xff]
        %v1942 = vld [vmem:[%s11 + $0x18] sm:$0xf]
        %v1943 = vld [vmem:[%s11 + $0x1c] sm:$0xff]
        %v1944 = vld [vmem:[%s11 + $0x24] sm:$0xff]
        %v1945 = vld [vmem:[%s11 + $0x2c] sm:$0xff]
        %v1946 = vld [vmem:[%s11 + $0x34] sm:$0xf]
        %v1947 = vld [vmem:[%s11 + $0x38] sm:$0xff]
        %v1948 = vld [vmem:[%s11 + $0x40] sm:$0xff]
        %v1949 = vld [vmem:[%s11 + $0x48] sm:$0xff]
        %v1950 = vld [vmem:[%s11 + $0x50] sm:$0xf]
        %v1951 = vld [vmem:[%s11 + $0x54] sm:$0xff]
        %v1952 = vld [vmem:[%s11 + $0x5c] sm:$0xff]
        %v1953 = vld [vmem:[%s11 + $0x64] sm:$0xff]
        %v1954 = vld [vmem:[%s11 + $0x6c] sm:$0xf]
        %v1955 = vld [vmem:[%s11 + $0x70] sm:$0xff]
        %v1956 = vld [vmem:[%s11 + $0x78] sm:$0xff]
        %v1957 = vld [vmem:[%s11 + $0x80] sm:$0xff]
        %v1958 = vld [vmem:[%s11 + $0x88] sm:$0xf]
        %v1959 = vld [vmem:[%s11 + $0x8c] sm:$0xff]
        %v1960 = vld [vmem:[%s11 + $0x94] sm:$0xff]
        %v1961 = vld [vmem:[%s11 + $0x9c] sm:$0xff]
        %v1962 = vld [vmem:[%s11 + $0xa4] sm:$0xf]
        %v1963 = vld [vmem:[%s11 + $0xa8] sm:$0xff]
        %v1964 = vld [vmem:[%s11 + $0xb0] sm:$0xff]
        %v1965 = vld [vmem:[%s11 + $0xb8] sm:$0xff]
        %v1966 = vld [vmem:[%s11 + $0xc0] sm:$0xf]
        %v1967 = vld [vmem:[%s11 + $0xc4] sm:$0xff]
        %v1968 = vld [vmem:[%s11 + $0xcc] sm:$0xff]
        %v1969 = vld [vmem:[%s11 + $0xd4] sm:$0xff]
        %v1970 = vld [vmem:[%s11 + $0xdc] sm:$0xf]
        %v1971 = vld [vmem:[%s11 + $0xe0] sm:$0xff]
        %v1972 = vld [vmem:[%s11 + $0xe8] sm:$0xff]
        %v1973 = vld [vmem:[%s11 + $0xf0] sm:$0xff]
        %v1974 = vld [vmem:[%s11 + $0xf8] sm:$0xf]
        %v1975 = vld [vmem:[%s11 + $0xfc] sm:$0xff]
        %v1976 = vld [vmem:[%s11 + $0x104] sm:$0xff]
        %v1977 = vld [vmem:[%s11 + $0x10c] sm:$0xff]
        %v1978 = vld [vmem:[%s11 + $0x114] sm:$0xf]
        %v1979 = vld [vmem:[%s11 + $0x118] sm:$0xff]
        %v1980 = vld [vmem:[%s11 + $0x120] sm:$0xff]
        %v1981 = vld [vmem:[%s11 + $0x128] sm:$0xff]
        %v1982 = vld [vmem:[%s11 + $0x130] sm:$0xf]
        %v1983 = vld [vmem:[%s11 + $0x134] sm:$0xff]
        %v1984 = vld [vmem:[%s11 + $0x13c] sm:$0xff]
        %v1985 = vld [vmem:[%s11 + $0x144] sm:$0xff]
        %v1986 = vld [vmem:[%s11 + $0x14c] sm:$0xf]
        %v1987 = vld [vmem:[%s11 + $0x150] sm:$0xff]
        %v1988 = vld [vmem:[%s11 + $0x158] sm:$0xff]
        %v1989 = vld [vmem:[%s11 + $0x160] sm:$0xff]
        %v1990 = vld [vmem:[%s11 + $0x168] sm:$0xf]
        %v1991 = vld [vmem:[%s11 + $0x16c] sm:$0xff]
        %v1992 = vld [vmem:[%s11 + $0x174] sm:$0xff]
        %v1993 = vld [vmem:[%s11 + $0x17c] sm:$0xff]
        %v1994 = vld [vmem:[%s11 + $0x184] sm:$0xf]
        %v1995 = vld [vmem:[%s11 + $0x188] sm:$0xff]
        %v1996 = vld [vmem:[%s11 + $0x190] sm:$0xff]
        %v1997 = vld [vmem:[%s11 + $0x198] sm:$0xff]
        %v1998 = vld [vmem:[%s11 + $0x1a0] sm:$0xf]
        %v1999 = vld [vmem:[%s11 + $0x1a4] sm:$0xff]
        %v2000 = vld [vmem:[%s11 + $0x1ac] sm:$0xff]
        %v2001 = vld [vmem:[%s11 + $0x1b4] sm:$0xff]
        %v2002 = vld [vmem:[%s11 + $0x1bc] sm:$0xf]
        %v2003 = vld [vmem:[%s11 + $0x1c0] sm:$0xff]
        %v2004 = vld [vmem:[%s11 + $0x1c8] sm:$0xff]
        %v2005 = vld [vmem:[%s11 + $0x1d0] sm:$0xff]
        %v2006 = vld [vmem:[%s11 + $0x1d8] sm:$0xf]
        %v2007 = vld [vmem:[%s11 + $0x1dc] sm:$0xff]
        %v2008 = vld [vmem:[%s11 + $0x1e4] sm:$0xff]
        %v2009 = vld [vmem:[%s11 + $0x1ec] sm:$0xff]
        %v2010 = vld [vmem:[%s11 + $0x1f4] sm:$0xf]
        %v2011 = vld [vmem:[%s11 + $0x1f8] sm:$0xff]
        %v2012 = vld [vmem:[%s11 + $0x200] sm:$0xff]
        %v2013 = vld [vmem:[%s11 + $0x208] sm:$0xff]
        %v2014 = vld [vmem:[%s11 + $0x210] sm:$0xf]
        %v2015 = vld [vmem:[%s11 + $0x214] sm:$0xff]
        %v2016 = vld [vmem:[%s11 + $0x21c] sm:$0xff]
        %v2017 = vld [vmem:[%s11 + $0x224] sm:$0xff]
        %v2018 = vld [vmem:[%s11 + $0x22c] sm:$0xf]
        %v2019 = vld [vmem:[%s11 + $0x230] sm:$0xff]
        %v2020 = vld [vmem:[%s11 + $0x238] sm:$0xff]
        %v2021 = vld [vmem:[%s11 + $0x240] sm:$0xff]
        %v2022 = vld [vmem:[%s11 + $0x248] sm:$0xf]
        %v2023 = vld [vmem:[%s11 + $0x24c] sm:$0xff]
        %v2024 = vld [vmem:[%s11 + $0x254] sm:$0xff]
        %v2025 = vld [vmem:[%s11 + $0x25c] sm:$0xff]
        %v2026 = vld [vmem:[%s11 + $0x264] sm:$0xf]
        %v2027 = vld [vmem:[%s11 + $0x268] sm:$0xff]
        %v2028 = vld [vmem:[%s11 + $0x270] sm:$0xff]
        %v2029 = vld [vmem:[%s11 + $0x278] sm:$0xff]
        %v2030 = vld [vmem:[%s11 + $0x280] sm:$0xf]
        %v2031 = vld [vmem:[%s11 + $0x284] sm:$0xff]
        %v2032 = vld [vmem:[%s11 + $0x28c] sm:$0xff]
        %v2033 = vld [vmem:[%s11 + $0x294] sm:$0xff]
        %v2034 = vld [vmem:[%s11 + $0x29c] sm:$0xf]
        %v2035 = vld [vmem:[%s11 + $0x2a0] sm:$0xff]
        %v2036 = vld [vmem:[%s11 + $0x2a8] sm:$0xff]
        %v2037 = vld [vmem:[%s11 + $0x2b0] sm:$0xff]
        %v2038 = vld [vmem:[%s11 + $0x2b8] sm:$0xf]
        %v2039 = vld [vmem:[%s11 + $0x2bc] sm:$0xff]
        %v2040 = vld [vmem:[%s11 + $0x2c4] sm:$0xff]
        %v2041 = vld [vmem:[%s11 + $0x2cc] sm:$0xff]
        %v2042 = vld [vmem:[%s11 + $0x2d4] sm:$0xf]
        %v2043 = vld [vmem:[%s11 + $0x2d8] sm:$0xff]
        %v2044 = vld [vmem:[%s11 + $0x2e0] sm:$0xff]
        %v2045 = vld [vmem:[%s11 + $0x2e8] sm:$0xff]
        %v2046 = vld [vmem:[%s11 + $0x2f0] sm:$0xf]
        %v2047 = vld [vmem:[%s11 + $0x2f4] sm:$0xff]
        %v2048 = vld [vmem:[%s11 + $0x2fc] sm:$0xff]
        %v2049 = vld [vmem:[%s11 + $0x304] sm:$0xff]
        %v2050 = vld [vmem:[%s11 + $0x30c] sm:$0xf]
        %v2051 = vld [vmem:[%s11 + $0x310] sm:$0xff]
        %v2052 = vld [vmem:[%s11 + $0x318] sm:$0xff]
        %v2053 = vld [vmem:[%s11 + $0x320] sm:$0xff]
        %v2054 = vld [vmem:[%s11 + $0x328] sm:$0xf]
        %v2055 = vld [vmem:[%s11 + $0x32c] sm:$0xff]
        %v2056 = vld [vmem:[%s11 + $0x334] sm:$0xff]
        %v2057 = vld [vmem:[%s11 + $0x33c] sm:$0xff]
        %v2058 = vld [vmem:[%s11 + $0x344] sm:$0xf]
        %v2059 = vld [vmem:[%s11 + $0x348] sm:$0xff]
        %v2060 = vld [vmem:[%s11 + $0x350] sm:$0xff]
        %v2061 = vld [vmem:[%s11 + $0x358] sm:$0xff]
        %v2062 = vld [vmem:[%s11 + $0x360] sm:$0xf]
        %v2063 = vld [vmem:[%s11 + $0x364] sm:$0xff]
        %v2064 = vld [vmem:[%s11 + $0x36c] sm:$0xff]
        %v2065 = vld [vmem:[%s11 + $0x374] sm:$0xff]
        %v2066 = vld [vmem:[%s11 + $0x37c] sm:$0xf]
        %v2067 = vld [vmem:[%s12] sm:$0x7f]
        %v2069 = vlaneseq
        %v2070 = vshrl.u32 %v2069, 7
        %v2071 = vsub.s32 0, %v2070
        %v2072 = vrot.slane %v2067, %v2071
        %v2073 = vlaneseq
        %v2074 = vshrl.u32 %v2073, 7
        %v2075 = vsub.s32 1, %v2074
        %v2076 = vrot.slane %v2067, %v2075
        %v2077 = vlaneseq
        %v2078 = vshrl.u32 %v2077, 7
        %v2079 = vsub.s32 2, %v2078
        %v2080 = vrot.slane %v2067, %v2079
        %v2081 = vlaneseq
        %v2082 = vshrl.u32 %v2081, 7
        %v2083 = vsub.s32 3, %v2082
        %v2084 = vrot.slane %v2067, %v2083
        %v2085 = vlaneseq
        %v2086 = vshrl.u32 %v2085, 7
        %v2087 = vsub.s32 4, %v2086
        %v2088 = vrot.slane %v2067, %v2087
        %v2089 = vlaneseq
        %v2090 = vshrl.u32 %v2089, 7
        %v2091 = vsub.s32 5, %v2090
        %v2092 = vrot.slane %v2067, %v2091
        %v2093 = vlaneseq
        %v2094 = vshrl.u32 %v2093, 7
        %v2095 = vsub.s32 6, %v2094
        %v2096 = vrot.slane %v2067, %v2095
        %v2232 = vunpack.c.l.b16 %v1939
        %v2233 = vunpack.c.h.b16 %v1939
        %v2234 = vunpack.c.l.b16 %v1940
        %v2235 = vunpack.c.h.b16 %v1940
        %v2236 = vunpack.c.l.b16 %v1941
        %v2237 = vunpack.c.h.b16 %v1941
        %v2238 = vunpack.c.l.b16 %v1942
        %v2239 = vunpack.c.l.b16 %v1943
        %v2240 = vunpack.c.h.b16 %v1943
        %v2241 = vunpack.c.l.b16 %v1944
        %v2242 = vunpack.c.h.b16 %v1944
        %v2243 = vunpack.c.l.b16 %v1945
        %v2244 = vunpack.c.h.b16 %v1945
        %v2245 = vunpack.c.l.b16 %v1946
        %v2246 = vunpack.c.l.b16 %v1947
        %v2247 = vunpack.c.h.b16 %v1947
        %v2248 = vunpack.c.l.b16 %v1948
        %v2249 = vunpack.c.h.b16 %v1948
        %v2250 = vunpack.c.l.b16 %v1949
        %v2251 = vunpack.c.h.b16 %v1949
        %v2252 = vunpack.c.l.b16 %v1950
        %v2253 = vunpack.c.l.b16 %v1951
        %v2254 = vunpack.c.h.b16 %v1951
        %v2255 = vunpack.c.l.b16 %v1952
        %v2256 = vunpack.c.h.b16 %v1952
        %v2257 = vunpack.c.l.b16 %v1953
        %v2258 = vunpack.c.h.b16 %v1953
        %v2259 = vunpack.c.l.b16 %v1954
        %v2260 = vunpack.c.l.b16 %v1955
        %v2261 = vunpack.c.h.b16 %v1955
        %v2262 = vunpack.c.l.b16 %v1956
        %v2263 = vunpack.c.h.b16 %v1956
        %v2264 = vunpack.c.l.b16 %v1957
        %v2265 = vunpack.c.h.b16 %v1957
        %v2266 = vunpack.c.l.b16 %v1958
        %v2267 = vunpack.c.l.b16 %v1959
        %v2268 = vunpack.c.h.b16 %v1959
        %v2269 = vunpack.c.l.b16 %v1960
        %v2270 = vunpack.c.h.b16 %v1960
        %v2271 = vunpack.c.l.b16 %v1961
        %v2272 = vunpack.c.h.b16 %v1961
        %v2273 = vunpack.c.l.b16 %v1962
        %v2274 = vunpack.c.l.b16 %v1963
        %v2275 = vunpack.c.h.b16 %v1963
        %v2276 = vunpack.c.l.b16 %v1964
        %v2277 = vunpack.c.h.b16 %v1964
        %v2278 = vunpack.c.l.b16 %v1965
        %v2279 = vunpack.c.h.b16 %v1965
        %v2280 = vunpack.c.l.b16 %v1966
        %v2281 = vunpack.c.l.b16 %v1967
        %v2282 = vunpack.c.h.b16 %v1967
        %v2283 = vunpack.c.l.b16 %v1968
        %v2284 = vunpack.c.h.b16 %v1968
        %v2285 = vunpack.c.l.b16 %v1969
        %v2286 = vunpack.c.h.b16 %v1969
        %v2287 = vunpack.c.l.b16 %v1970
        %v2288 = vunpack.c.l.b16 %v1971
        %v2289 = vunpack.c.h.b16 %v1971
        %v2290 = vunpack.c.l.b16 %v1972
        %v2291 = vunpack.c.h.b16 %v1972
        %v2292 = vunpack.c.l.b16 %v1973
        %v2293 = vunpack.c.h.b16 %v1973
        %v2294 = vunpack.c.l.b16 %v1974
        %v2295 = vunpack.c.l.b16 %v1975
        %v2296 = vunpack.c.h.b16 %v1975
        %v2297 = vunpack.c.l.b16 %v1976
        %v2298 = vunpack.c.h.b16 %v1976
        %v2299 = vunpack.c.l.b16 %v1977
        %v2300 = vunpack.c.h.b16 %v1977
        %v2301 = vunpack.c.l.b16 %v1978
        %v2302 = vunpack.c.l.b16 %v1979
        %v2303 = vunpack.c.h.b16 %v1979
        %v2304 = vunpack.c.l.b16 %v1980
        %v2305 = vunpack.c.h.b16 %v1980
        %v2306 = vunpack.c.l.b16 %v1981
        %v2307 = vunpack.c.h.b16 %v1981
        %v2308 = vunpack.c.l.b16 %v1982
        %v2309 = vunpack.c.l.b16 %v1983
        %v2310 = vunpack.c.h.b16 %v1983
        %v2311 = vunpack.c.l.b16 %v1984
        %v2312 = vunpack.c.h.b16 %v1984
        %v2313 = vunpack.c.l.b16 %v1985
        %v2314 = vunpack.c.h.b16 %v1985
        %v2315 = vunpack.c.l.b16 %v1986
        %v2316 = vunpack.c.l.b16 %v1987
        %v2317 = vunpack.c.h.b16 %v1987
        %v2318 = vunpack.c.l.b16 %v1988
        %v2319 = vunpack.c.h.b16 %v1988
        %v2320 = vunpack.c.l.b16 %v1989
        %v2321 = vunpack.c.h.b16 %v1989
        %v2322 = vunpack.c.l.b16 %v1990
        %v2323 = vunpack.c.l.b16 %v1991
        %v2324 = vunpack.c.h.b16 %v1991
        %v2325 = vunpack.c.l.b16 %v1992
        %v2326 = vunpack.c.h.b16 %v1992
        %v2327 = vunpack.c.l.b16 %v1993
        %v2328 = vunpack.c.h.b16 %v1993
        %v2329 = vunpack.c.l.b16 %v1994
        %v2330 = vunpack.c.l.b16 %v1995
        %v2331 = vunpack.c.h.b16 %v1995
        %v2332 = vunpack.c.l.b16 %v1996
        %v2333 = vunpack.c.h.b16 %v1996
        %v2334 = vunpack.c.l.b16 %v1997
        %v2335 = vunpack.c.h.b16 %v1997
        %v2336 = vunpack.c.l.b16 %v1998
        %v2337 = vunpack.c.l.b16 %v1999
        %v2338 = vunpack.c.h.b16 %v1999
        %v2339 = vunpack.c.l.b16 %v2000
        %v2340 = vunpack.c.h.b16 %v2000
        %v2341 = vunpack.c.l.b16 %v2001
        %v2342 = vunpack.c.h.b16 %v2001
        %v2343 = vunpack.c.l.b16 %v2002
        %v2344 = vunpack.c.l.b16 %v2003
        %v2345 = vunpack.c.h.b16 %v2003
        %v2346 = vunpack.c.l.b16 %v2004
        %v2347 = vunpack.c.h.b16 %v2004
        %v2348 = vunpack.c.l.b16 %v2005
        %v2349 = vunpack.c.h.b16 %v2005
        %v2350 = vunpack.c.l.b16 %v2006
        %v2351 = vunpack.c.l.b16 %v2007
        %v2352 = vunpack.c.h.b16 %v2007
        %v2353 = vunpack.c.l.b16 %v2008
        %v2354 = vunpack.c.h.b16 %v2008
        %v2355 = vunpack.c.l.b16 %v2009
        %v2356 = vunpack.c.h.b16 %v2009
        %v2357 = vunpack.c.l.b16 %v2010
        %v2358 = vunpack.c.l.b16 %v2011
        %v2359 = vunpack.c.h.b16 %v2011
        %v2360 = vunpack.c.l.b16 %v2012
        %v2361 = vunpack.c.h.b16 %v2012
        %v2362 = vunpack.c.l.b16 %v2013
        %v2363 = vunpack.c.h.b16 %v2013
        %v2364 = vunpack.c.l.b16 %v2014
        %v2365 = vunpack.c.l.b16 %v2015
        %v2366 = vunpack.c.h.b16 %v2015
        %v2367 = vunpack.c.l.b16 %v2016
        %v2368 = vunpack.c.h.b16 %v2016
        %v2369 = vunpack.c.l.b16 %v2017
        %v2370 = vunpack.c.h.b16 %v2017
        %v2371 = vunpack.c.l.b16 %v2018
        %v2372 = vunpack.c.l.b16 %v2019
        %v2373 = vunpack.c.h.b16 %v2019
        %v2374 = vunpack.c.l.b16 %v2020
        %v2375 = vunpack.c.h.b16 %v2020
        %v2376 = vunpack.c.l.b16 %v2021
        %v2377 = vunpack.c.h.b16 %v2021
        %v2378 = vunpack.c.l.b16 %v2022
        %v2379 = vunpack.c.l.b16 %v2023
        %v2380 = vunpack.c.h.b16 %v2023
        %v2381 = vunpack.c.l.b16 %v2024
        %v2382 = vunpack.c.h.b16 %v2024
        %v2383 = vunpack.c.l.b16 %v2025
        %v2384 = vunpack.c.h.b16 %v2025
        %v2385 = vunpack.c.l.b16 %v2026
        %v2386 = vunpack.c.l.b16 %v2027
        %v2387 = vunpack.c.h.b16 %v2027
        %v2388 = vunpack.c.l.b16 %v2028
        %v2389 = vunpack.c.h.b16 %v2028
        %v2390 = vunpack.c.l.b16 %v2029
        %v2391 = vunpack.c.h.b16 %v2029
        %v2392 = vunpack.c.l.b16 %v2030
        %v2393 = vunpack.c.l.b16 %v2031
        %v2394 = vunpack.c.h.b16 %v2031
        %v2395 = vunpack.c.l.b16 %v2032
        %v2396 = vunpack.c.h.b16 %v2032
        %v2397 = vunpack.c.l.b16 %v2033
        %v2398 = vunpack.c.h.b16 %v2033
        %v2399 = vunpack.c.l.b16 %v2034
        %v2400 = vunpack.c.l.b16 %v2035
        %v2401 = vunpack.c.h.b16 %v2035
        %v2402 = vunpack.c.l.b16 %v2036
        %v2403 = vunpack.c.h.b16 %v2036
        %v2404 = vunpack.c.l.b16 %v2037
        %v2405 = vunpack.c.h.b16 %v2037
        %v2406 = vunpack.c.l.b16 %v2038
        %v2407 = vunpack.c.l.b16 %v2039
        %v2408 = vunpack.c.h.b16 %v2039
        %v2409 = vunpack.c.l.b16 %v2040
        %v2410 = vunpack.c.h.b16 %v2040
        %v2411 = vunpack.c.l.b16 %v2041
        %v2412 = vunpack.c.h.b16 %v2041
        %v2413 = vunpack.c.l.b16 %v2042
        %v2414 = vunpack.c.l.b16 %v2043
        %v2415 = vunpack.c.h.b16 %v2043
        %v2416 = vunpack.c.l.b16 %v2044
        %v2417 = vunpack.c.h.b16 %v2044
        %v2418 = vunpack.c.l.b16 %v2045
        %v2419 = vunpack.c.h.b16 %v2045
        %v2420 = vunpack.c.l.b16 %v2046
        %v2421 = vunpack.c.l.b16 %v2047
        %v2422 = vunpack.c.h.b16 %v2047
        %v2423 = vunpack.c.l.b16 %v2048
        %v2424 = vunpack.c.h.b16 %v2048
        %v2425 = vunpack.c.l.b16 %v2049
        %v2426 = vunpack.c.h.b16 %v2049
        %v2427 = vunpack.c.l.b16 %v2050
        %v2428 = vunpack.c.l.b16 %v2051
        %v2429 = vunpack.c.h.b16 %v2051
        %v2430 = vunpack.c.l.b16 %v2052
        %v2431 = vunpack.c.h.b16 %v2052
        %v2432 = vunpack.c.l.b16 %v2053
        %v2433 = vunpack.c.h.b16 %v2053
        %v2434 = vunpack.c.l.b16 %v2054
        %v2435 = vunpack.c.l.b16 %v2055
        %v2436 = vunpack.c.h.b16 %v2055
        %v2437 = vunpack.c.l.b16 %v2056
        %v2438 = vunpack.c.h.b16 %v2056
        %v2439 = vunpack.c.l.b16 %v2057
        %v2440 = vunpack.c.h.b16 %v2057
        %v2441 = vunpack.c.l.b16 %v2058
        %v2442 = vunpack.c.l.b16 %v2059
        %v2443 = vunpack.c.h.b16 %v2059
        %v2444 = vunpack.c.l.b16 %v2060
        %v2445 = vunpack.c.h.b16 %v2060
        %v2446 = vunpack.c.l.b16 %v2061
        %v2447 = vunpack.c.h.b16 %v2061
        %v2448 = vunpack.c.l.b16 %v2062
        %v2449 = vunpack.c.l.b16 %v2063
        %v2450 = vunpack.c.h.b16 %v2063
        %v2451 = vunpack.c.l.b16 %v2064
        %v2452 = vunpack.c.h.b16 %v2064
        %v2453 = vunpack.c.l.b16 %v2065
        %v2454 = vunpack.c.h.b16 %v2065
        %v2455 = vunpack.c.l.b16 %v2066
        %v2456 = vpack.c.b16 %v2239, %v2232
        %v2457 = vpack.c.b16 %v2240, %v2233
        %v2458 = vpack.c.b16 %v2241, %v2234
        %v2459 = vpack.c.b16 %v2242, %v2235
        %v2460 = vpack.c.b16 %v2243, %v2236
        %v2461 = vpack.c.b16 %v2244, %v2237
        %v2462 = vpack.c.b16 %v2245, %v2238
        %v2463 = vpack.c.b16 %v2253, %v2246
        %v2464 = vpack.c.b16 %v2254, %v2247
        %v2465 = vpack.c.b16 %v2255, %v2248
        %v2466 = vpack.c.b16 %v2256, %v2249
        %v2467 = vpack.c.b16 %v2257, %v2250
        %v2468 = vpack.c.b16 %v2258, %v2251
        %v2469 = vpack.c.b16 %v2259, %v2252
        %v2470 = vpack.c.b16 %v2267, %v2260
        %v2471 = vpack.c.b16 %v2268, %v2261
        %v2472 = vpack.c.b16 %v2269, %v2262
        %v2473 = vpack.c.b16 %v2270, %v2263
        %v2474 = vpack.c.b16 %v2271, %v2264
        %v2475 = vpack.c.b16 %v2272, %v2265
        %v2476 = vpack.c.b16 %v2273, %v2266
        %v2477 = vpack.c.b16 %v2281, %v2274
        %v2478 = vpack.c.b16 %v2282, %v2275
        %v2479 = vpack.c.b16 %v2283, %v2276
        %v2480 = vpack.c.b16 %v2284, %v2277
        %v2481 = vpack.c.b16 %v2285, %v2278
        %v2482 = vpack.c.b16 %v2286, %v2279
        %v2483 = vpack.c.b16 %v2287, %v2280
        %v2484 = vpack.c.b16 %v2295, %v2288
        %v2485 = vpack.c.b16 %v2296, %v2289
        %v2486 = vpack.c.b16 %v2297, %v2290
        %v2487 = vpack.c.b16 %v2298, %v2291
        %v2488 = vpack.c.b16 %v2299, %v2292
        %v2489 = vpack.c.b16 %v2300, %v2293
        %v2490 = vpack.c.b16 %v2301, %v2294
        %v2491 = vpack.c.b16 %v2309, %v2302
        %v2492 = vpack.c.b16 %v2310, %v2303
        %v2493 = vpack.c.b16 %v2311, %v2304
        %v2494 = vpack.c.b16 %v2312, %v2305
        %v2495 = vpack.c.b16 %v2313, %v2306
        %v2496 = vpack.c.b16 %v2314, %v2307
        %v2497 = vpack.c.b16 %v2315, %v2308
        %v2498 = vpack.c.b16 %v2323, %v2316
        %v2499 = vpack.c.b16 %v2324, %v2317
        %v2500 = vpack.c.b16 %v2325, %v2318
        %v2501 = vpack.c.b16 %v2326, %v2319
        %v2502 = vpack.c.b16 %v2327, %v2320
        %v2503 = vpack.c.b16 %v2328, %v2321
        %v2504 = vpack.c.b16 %v2329, %v2322
        %v2505 = vpack.c.b16 %v2337, %v2330
        %v2506 = vpack.c.b16 %v2338, %v2331
        %v2507 = vpack.c.b16 %v2339, %v2332
        %v2508 = vpack.c.b16 %v2340, %v2333
        %v2509 = vpack.c.b16 %v2341, %v2334
        %v2510 = vpack.c.b16 %v2342, %v2335
        %v2511 = vpack.c.b16 %v2343, %v2336
        %v2512 = vpack.c.b16 %v2351, %v2344
        %v2513 = vpack.c.b16 %v2352, %v2345
        %v2514 = vpack.c.b16 %v2353, %v2346
        %v2515 = vpack.c.b16 %v2354, %v2347
        %v2516 = vpack.c.b16 %v2355, %v2348
        %v2517 = vpack.c.b16 %v2356, %v2349
        %v2518 = vpack.c.b16 %v2357, %v2350
        %v2519 = vpack.c.b16 %v2365, %v2358
        %v2520 = vpack.c.b16 %v2366, %v2359
        %v2521 = vpack.c.b16 %v2367, %v2360
        %v2522 = vpack.c.b16 %v2368, %v2361
        %v2523 = vpack.c.b16 %v2369, %v2362
        %v2524 = vpack.c.b16 %v2370, %v2363
        %v2525 = vpack.c.b16 %v2371, %v2364
        %v2526 = vpack.c.b16 %v2379, %v2372
        %v2527 = vpack.c.b16 %v2380, %v2373
        %v2528 = vpack.c.b16 %v2381, %v2374
        %v2529 = vpack.c.b16 %v2382, %v2375
        %v2530 = vpack.c.b16 %v2383, %v2376
        %v2531 = vpack.c.b16 %v2384, %v2377
        %v2532 = vpack.c.b16 %v2385, %v2378
        %v2533 = vpack.c.b16 %v2393, %v2386
        %v2534 = vpack.c.b16 %v2394, %v2387
        %v2535 = vpack.c.b16 %v2395, %v2388
        %v2536 = vpack.c.b16 %v2396, %v2389
        %v2537 = vpack.c.b16 %v2397, %v2390
        %v2538 = vpack.c.b16 %v2398, %v2391
        %v2539 = vpack.c.b16 %v2399, %v2392
        %v2540 = vpack.c.b16 %v2407, %v2400
        %v2541 = vpack.c.b16 %v2408, %v2401
        %v2542 = vpack.c.b16 %v2409, %v2402
        %v2543 = vpack.c.b16 %v2410, %v2403
        %v2544 = vpack.c.b16 %v2411, %v2404
        %v2545 = vpack.c.b16 %v2412, %v2405
        %v2546 = vpack.c.b16 %v2413, %v2406
        %v2547 = vpack.c.b16 %v2421, %v2414
        %v2548 = vpack.c.b16 %v2422, %v2415
        %v2549 = vpack.c.b16 %v2423, %v2416
        %v2550 = vpack.c.b16 %v2424, %v2417
        %v2551 = vpack.c.b16 %v2425, %v2418
        %v2552 = vpack.c.b16 %v2426, %v2419
        %v2553 = vpack.c.b16 %v2427, %v2420
        %v2554 = vpack.c.b16 %v2435, %v2428
        %v2555 = vpack.c.b16 %v2436, %v2429
        %v2556 = vpack.c.b16 %v2437, %v2430
        %v2557 = vpack.c.b16 %v2438, %v2431
        %v2558 = vpack.c.b16 %v2439, %v2432
        %v2559 = vpack.c.b16 %v2440, %v2433
        %v2560 = vpack.c.b16 %v2441, %v2434
        %v2561 = vpack.c.b16 %v2449, %v2442
        %v2562 = vpack.c.b16 %v2450, %v2443
        %v2563 = vpack.c.b16 %v2451, %v2444
        %v2564 = vpack.c.b16 %v2452, %v2445
        %v2565 = vpack.c.b16 %v2453, %v2446
        %v2566 = vpack.c.b16 %v2454, %v2447
        %v2567 = vpack.c.b16 %v2455, %v2448
        %2680 = vmatprep.subr.bf16.mxu0 %v2506
        %2681 = vmatpush1.bf16.msra.mxu0 %v2505
        %2682 = vmatprep.subr.bf16.mxu0 %v2499
        %2683 = vmatpush1.bf16.msra.mxu0 %v2498
        %2684 = vmatprep.subr.bf16.mxu0 %v2492
        %2685 = vmatpush1.bf16.msra.mxu0 %v2491
        %2686 = vmatprep.subr.bf16.mxu0 %v2485
        %2687 = vmatpush1.bf16.msra.mxu0 %v2484
        %2688 = vmatprep.subr.bf16.mxu0 %v2478
        %2689 = vmatpush1.bf16.msra.mxu0 %v2477
        %2690 = vmatprep.subr.bf16.mxu0 %v2471
        %2691 = vmatpush1.bf16.msra.mxu0 %v2470
        %2692 = vmatprep.subr.bf16.mxu0 %v2464
        %2693 = vmatpush1.bf16.msra.mxu0 %v2463
        %2694 = vmatprep.subr.bf16.mxu0 %v2457
        %2695 = vmatpush1.bf16.msra.mxu0 %v2456
        %2696 = vmatprep.subr.bf16.mxu0 %v2562
        %2697 = vmatpush2.bf16.msra.mxu0 %v2561
        %2698 = vmatprep.subr.bf16.mxu0 %v2555
        %2699 = vmatpush2.bf16.msra.mxu0 %v2554
        %2700 = vmatprep.subr.bf16.mxu0 %v2548
        %2701 = vmatpush2.bf16.msra.mxu0 %v2547
        %2702 = vmatprep.subr.bf16.mxu0 %v2541
        %2703 = vmatpush2.bf16.msra.mxu0 %v2540
        %2704 = vmatprep.subr.bf16.mxu0 %v2534
        %2705 = vmatpush2.bf16.msra.mxu0 %v2533
        %2706 = vmatprep.subr.bf16.mxu0 %v2527
        %2707 = vmatpush2.bf16.msra.mxu0 %v2526
        %2708 = vmatprep.subr.bf16.mxu0 %v2520
        %2709 = vmatpush2.bf16.msra.mxu0 %v2519
        %2710 = vmatprep.subr.bf16.mxu0 %v2513
        %2711 = vmatpush2.bf16.msra.mxu0 %v2512
        %2712 = vmatprep.mubr.bf16.mxu0 %v1936
        %2713 = vmatmul.mubr.bf16.gmra.mxu0 %v1935
        %v2714 = vpop.f32.mrf.mxu0
        %v2715 = vadd.f32 %v2072, %v2714
        %v2716 = vpop.f32.mrf.mxu0
        %v2717 = vadd.f32 %v2076, %v2716
        %v2718 = vpop.f32.mrf.mxu0
        %v2719 = vadd.f32 %v2072, %v2718
        %v2720 = vpop.f32.mrf.mxu0
        %v2721 = vadd.f32 %v2076, %v2720
        %2722 = vmatprep.mubr.bf16.mxu0 %v1938
        %2723 = vmatmul.mubr.bf16.gmra.mxu0 %v1937
        %v2724 = vpop.f32.mrf.mxu0
        %v2725 = vadd.f32 %v2072, %v2724
        %v2726 = vpop.f32.mrf.mxu0
        %v2727 = vadd.f32 %v2076, %v2726
        %v2728 = vpop.f32.mrf.mxu0
        %v2729 = vadd.f32 %v2072, %v2728
        %v2730 = vpop.f32.mrf.mxu0
        %v2731 = vadd.f32 %v2076, %v2730
        %2732 = vdwg.mxu0
        %2733 = vmatprep.subr.bf16.mxu0 %v2508
        %2734 = vmatpush1.bf16.msra.mxu0 %v2507
        %2735 = vmatprep.subr.bf16.mxu0 %v2501
        %2736 = vmatpush1.bf16.msra.mxu0 %v2500
        %2737 = vmatprep.subr.bf16.mxu0 %v2494
        %2738 = vmatpush1.bf16.msra.mxu0 %v2493
        %2739 = vmatprep.subr.bf16.mxu0 %v2487
        %2740 = vmatpush1.bf16.msra.mxu0 %v2486
        %2741 = vmatprep.subr.bf16.mxu0 %v2480
        %2742 = vmatpush1.bf16.msra.mxu0 %v2479
        %2743 = vmatprep.subr.bf16.mxu0 %v2473
        %2744 = vmatpush1.bf16.msra.mxu0 %v2472
        %2745 = vmatprep.subr.bf16.mxu0 %v2466
        %2746 = vmatpush1.bf16.msra.mxu0 %v2465
        %2747 = vmatprep.subr.bf16.mxu0 %v2459
        %2748 = vmatpush1.bf16.msra.mxu0 %v2458
        %2749 = vmatprep.subr.bf16.mxu0 %v2564
        %2750 = vmatpush2.bf16.msra.mxu0 %v2563
        %2751 = vmatprep.subr.bf16.mxu0 %v2557
        %2752 = vmatpush2.bf16.msra.mxu0 %v2556
        %2753 = vmatprep.subr.bf16.mxu0 %v2550
        %2754 = vmatpush2.bf16.msra.mxu0 %v2549
        %2755 = vmatprep.subr.bf16.mxu0 %v2543
        %2756 = vmatpush2.bf16.msra.mxu0 %v2542
        %2757 = vmatprep.subr.bf16.mxu0 %v2536
        %2758 = vmatpush2.bf16.msra.mxu0 %v2535
        %2759 = vmatprep.subr.bf16.mxu0 %v2529
        %2760 = vmatpush2.bf16.msra.mxu0 %v2528
        %2761 = vmatprep.subr.bf16.mxu0 %v2522
        %2762 = vmatpush2.bf16.msra.mxu0 %v2521
        %2763 = vmatprep.subr.bf16.mxu0 %v2515
        %2764 = vmatpush2.bf16.msra.mxu0 %v2514
        %2765 = vmatprep.mubr.bf16.mxu0 %v1936
        %2766 = vmatmul.mubr.bf16.gmra.mxu0 %v1935
        %v2767 = vpop.f32.mrf.mxu0
        %v2768 = vadd.f32 %v2080, %v2767
        %v2769 = vpop.f32.mrf.mxu0
        %v2770 = vadd.f32 %v2084, %v2769
        %v2771 = vpop.f32.mrf.mxu0
        %v2772 = vadd.f32 %v2080, %v2771
        %v2773 = vpop.f32.mrf.mxu0
        %v2774 = vadd.f32 %v2084, %v2773
        %2775 = vmatprep.mubr.bf16.mxu0 %v1938
        %2776 = vmatmul.mubr.bf16.gmra.mxu0 %v1937
        %v2777 = vpop.f32.mrf.mxu0
        %v2778 = vadd.f32 %v2080, %v2777
        %v2779 = vpop.f32.mrf.mxu0
        %v2780 = vadd.f32 %v2084, %v2779
        %v2781 = vpop.f32.mrf.mxu0
        %v2782 = vadd.f32 %v2080, %v2781
        %v2783 = vpop.f32.mrf.mxu0
        %v2784 = vadd.f32 %v2084, %v2783
        %2785 = vdwg.mxu0
        %2786 = vmatprep.subr.bf16.mxu0 %v2510
        %2787 = vmatpush1.bf16.msra.mxu0 %v2509
        %2788 = vmatprep.subr.bf16.mxu0 %v2503
        %2789 = vmatpush1.bf16.msra.mxu0 %v2502
        %2790 = vmatprep.subr.bf16.mxu0 %v2496
        %2791 = vmatpush1.bf16.msra.mxu0 %v2495
        %2792 = vmatprep.subr.bf16.mxu0 %v2489
        %2793 = vmatpush1.bf16.msra.mxu0 %v2488
        %2794 = vmatprep.subr.bf16.mxu0 %v2482
        %2795 = vmatpush1.bf16.msra.mxu0 %v2481
        %2796 = vmatprep.subr.bf16.mxu0 %v2475
        %2797 = vmatpush1.bf16.msra.mxu0 %v2474
        %2798 = vmatprep.subr.bf16.mxu0 %v2468
        %2799 = vmatpush1.bf16.msra.mxu0 %v2467
        %2800 = vmatprep.subr.bf16.mxu0 %v2461
        %2801 = vmatpush1.bf16.msra.mxu0 %v2460
        %2802 = vmatprep.subr.bf16.mxu0 %v2566
        %2803 = vmatpush2.bf16.msra.mxu0 %v2565
        %2804 = vmatprep.subr.bf16.mxu0 %v2559
        %2805 = vmatpush2.bf16.msra.mxu0 %v2558
        %2806 = vmatprep.subr.bf16.mxu0 %v2552
        %2807 = vmatpush2.bf16.msra.mxu0 %v2551
        %2808 = vmatprep.subr.bf16.mxu0 %v2545
        %2809 = vmatpush2.bf16.msra.mxu0 %v2544
        %2810 = vmatprep.subr.bf16.mxu0 %v2538
        %2811 = vmatpush2.bf16.msra.mxu0 %v2537
        %2812 = vmatprep.subr.bf16.mxu0 %v2531
        %2813 = vmatpush2.bf16.msra.mxu0 %v2530
        %2814 = vmatprep.subr.bf16.mxu0 %v2524
        %2815 = vmatpush2.bf16.msra.mxu0 %v2523
        %2816 = vmatprep.subr.bf16.mxu0 %v2517
        %2817 = vmatpush2.bf16.msra.mxu0 %v2516
        %2818 = vmatprep.mubr.bf16.mxu0 %v1936
        %2819 = vmatmul.mubr.bf16.gmra.mxu0 %v1935
        %v2820 = vpop.f32.mrf.mxu0
        %v2821 = vadd.f32 %v2088, %v2820
        %v2822 = vpop.f32.mrf.mxu0
        %v2823 = vadd.f32 %v2092, %v2822
        %v2824 = vpop.f32.mrf.mxu0
        %v2825 = vadd.f32 %v2088, %v2824
        %v2826 = vpop.f32.mrf.mxu0
        %v2827 = vadd.f32 %v2092, %v2826
        %2828 = vmatprep.mubr.bf16.mxu0 %v1938
        %2829 = vmatmul.mubr.bf16.gmra.mxu0 %v1937
        %v2830 = vpop.f32.mrf.mxu0
        %v2831 = vadd.f32 %v2088, %v2830
        %v2832 = vpop.f32.mrf.mxu0
        %v2833 = vadd.f32 %v2092, %v2832
        %v2834 = vpop.f32.mrf.mxu0
        %v2835 = vadd.f32 %v2088, %v2834
        %v2836 = vpop.f32.mrf.mxu0
        %v2837 = vadd.f32 %v2092, %v2836
        %2838 = vdwg.mxu0
        %2839 = vmatprep.subr.bf16.mxu0 0
        %2840 = vmatpush1.bf16.msra.mxu0 %v2511
        %2841 = vmatprep.subr.bf16.mxu0 0
        %2842 = vmatpush1.bf16.msra.mxu0 %v2504
        %2843 = vmatprep.subr.bf16.mxu0 0
        %2844 = vmatpush1.bf16.msra.mxu0 %v2497
        %2845 = vmatprep.subr.bf16.mxu0 0
        %2846 = vmatpush1.bf16.msra.mxu0 %v2490
        %2847 = vmatprep.subr.bf16.mxu0 0
        %2848 = vmatpush1.bf16.msra.mxu0 %v2483
        %2849 = vmatprep.subr.bf16.mxu0 0
        %2850 = vmatpush1.bf16.msra.mxu0 %v2476
        %2851 = vmatprep.subr.bf16.mxu0 0
        %2852 = vmatpush1.bf16.msra.mxu0 %v2469
        %2853 = vmatprep.subr.bf16.mxu0 0
        %2854 = vmatpush1.bf16.msra.mxu0 %v2462
        %2855 = vmatprep.subr.bf16.mxu0 0
        %2856 = vmatpush2.bf16.msra.mxu0 %v2567
        %2857 = vmatprep.subr.bf16.mxu0 0
        %2858 = vmatpush2.bf16.msra.mxu0 %v2560
        %2859 = vmatprep.subr.bf16.mxu0 0
        %2860 = vmatpush2.bf16.msra.mxu0 %v2553
        %2861 = vmatprep.subr.bf16.mxu0 0
        %2862 = vmatpush2.bf16.msra.mxu0 %v2546
        %2863 = vmatprep.subr.bf16.mxu0 0
        %2864 = vmatpush2.bf16.msra.mxu0 %v2539
        %2865 = vmatprep.subr.bf16.mxu0 0
        %2866 = vmatpush2.bf16.msra.mxu0 %v2532
        %2867 = vmatprep.subr.bf16.mxu0 0
        %2868 = vmatpush2.bf16.msra.mxu0 %v2525
        %2869 = vmatprep.subr.bf16.mxu0 0
        %2870 = vmatpush2.bf16.msra.mxu0 %v2518
        %2871 = vmatprep.mubr.bf16.mxu0 %v1936
        %2872 = vmatmul.mubr.bf16.gmra.mxu0 %v1935
        %v2873 = vpop.f32.mrf.mxu0
        %v2874 = vadd.f32 %v2096, %v2873
        %v2875 = vpop.f32.mrf.mxu0
        %v2876 = vpop.f32.mrf.mxu0
        %v2877 = vadd.f32 %v2096, %v2876
        %v2878 = vpop.f32.mrf.mxu0
        %2879 = vmatprep.mubr.bf16.mxu0 %v1938
        %2880 = vmatmul.mubr.bf16.gmra.mxu0 %v1937
        %v2881 = vpop.f32.mrf.mxu0
        %v2882 = vadd.f32 %v2096, %v2881
        %v2883 = vpop.f32.mrf.mxu0
        %v2884 = vpop.f32.mrf.mxu0
        %v2885 = vadd.f32 %v2096, %v2884
        %v2886 = vpop.f32.mrf.mxu0
        %2887 = vdwg.mxu0
        %v2888 = vand.u32 2147483647, %v2715
        %v2889 = vand.u32 2147483647, %v2717
        %v2890 = vand.u32 2147483647, %v2768
        %v2891 = vand.u32 2147483647, %v2770
        %v2892 = vand.u32 2147483647, %v2821
        %v2893 = vand.u32 2147483647, %v2823
        %v2894 = vand.u32 2147483647, %v2874
        %v2895 = vand.u32 2147483647, %v2719
        %v2896 = vand.u32 2147483647, %v2721
        %v2897 = vand.u32 2147483647, %v2772
        %v2898 = vand.u32 2147483647, %v2774
        %v2899 = vand.u32 2147483647, %v2825
        %v2900 = vand.u32 2147483647, %v2827
        %v2901 = vand.u32 2147483647, %v2877
        %v2902 = vand.u32 2147483647, %v2725
        %v2903 = vand.u32 2147483647, %v2727
        %v2904 = vand.u32 2147483647, %v2778
        %v2905 = vand.u32 2147483647, %v2780
        %v2906 = vand.u32 2147483647, %v2831
        %v2907 = vand.u32 2147483647, %v2833
        %v2908 = vand.u32 2147483647, %v2882
        %v2909 = vand.u32 2147483647, %v2729
        %v2910 = vand.u32 2147483647, %v2731
        %v2911 = vand.u32 2147483647, %v2782
        %v2912 = vand.u32 2147483647, %v2784
        %v2913 = vand.u32 2147483647, %v2835
        %v2914 = vand.u32 2147483647, %v2837
        %v2915 = vand.u32 2147483647, %v2885
        %v2916 = vsub.f32 0.0, %v2888
        %v2917 = vsub.f32 0.0, %v2889
        %v2918 = vsub.f32 0.0, %v2890
        %v2919 = vsub.f32 0.0, %v2891
        %v2920 = vsub.f32 0.0, %v2892
        %v2921 = vsub.f32 0.0, %v2893
        %v2922 = vsub.f32 0.0, %v2894
        %v2923 = vsub.f32 0.0, %v2895
        %v2924 = vsub.f32 0.0, %v2896
        %v2925 = vsub.f32 0.0, %v2897
        %v2926 = vsub.f32 0.0, %v2898
        %v2927 = vsub.f32 0.0, %v2899
        %v2928 = vsub.f32 0.0, %v2900
        %v2929 = vsub.f32 0.0, %v2901
        %v2930 = vsub.f32 0.0, %v2902
        %v2931 = vsub.f32 0.0, %v2903
        %v2932 = vsub.f32 0.0, %v2904
        %v2933 = vsub.f32 0.0, %v2905
        %v2934 = vsub.f32 0.0, %v2906
        %v2935 = vsub.f32 0.0, %v2907
        %v2936 = vsub.f32 0.0, %v2908
        %v2937 = vsub.f32 0.0, %v2909
        %v2938 = vsub.f32 0.0, %v2910
        %v2939 = vsub.f32 0.0, %v2911
        %v2940 = vsub.f32 0.0, %v2912
        %v2941 = vsub.f32 0.0, %v2913
        %v2942 = vsub.f32 0.0, %v2914
        %v2943 = vsub.f32 0.0, %v2915
        %v2944 = vmul.f32 %v2916, 1.442695
        %v2945 = vpow.pop %v2944
        %v2946 = vmul.f32 %v2917, 1.442695
        %v2947 = vpow.pop %v2946
        %v2948 = vmul.f32 %v2918, 1.442695
        %v2949 = vpow.pop %v2948
        %v2950 = vmul.f32 %v2919, 1.442695
        %v2951 = vpow.pop %v2950
        %v2952 = vmul.f32 %v2920, 1.442695
        %v2953 = vpow.pop %v2952
        %v2954 = vmul.f32 %v2921, 1.442695
        %v2955 = vpow.pop %v2954
        %v2956 = vmul.f32 %v2922, 1.442695
        %v2957 = vpow.pop %v2956
        %v2958 = vmul.f32 %v2923, 1.442695
        %v2959 = vpow.pop %v2958
        %v2960 = vmul.f32 %v2924, 1.442695
        %v2961 = vpow.pop %v2960
        %v2962 = vmul.f32 %v2925, 1.442695
        %v2963 = vpow.pop %v2962
        %v2964 = vmul.f32 %v2926, 1.442695
        %v2965 = vpow.pop %v2964
        %v2966 = vmul.f32 %v2927, 1.442695
        %v2967 = vpow.pop %v2966
        %v2968 = vmul.f32 %v2928, 1.442695
        %v2969 = vpow.pop %v2968
        %v2970 = vmul.f32 %v2929, 1.442695
        %v2971 = vpow.pop %v2970
        %v2972 = vmul.f32 %v2930, 1.442695
        %v2973 = vpow.pop %v2972
        %v2974 = vmul.f32 %v2931, 1.442695
        %v2975 = vpow.pop %v2974
        %v2976 = vmul.f32 %v2932, 1.442695
        %v2977 = vpow.pop %v2976
        %v2978 = vmul.f32 %v2933, 1.442695
        %v2979 = vpow.pop %v2978
        %v2980 = vmul.f32 %v2934, 1.442695
        %v2981 = vpow.pop %v2980
        %v2982 = vmul.f32 %v2935, 1.442695
        %v2983 = vpow.pop %v2982
        %v2984 = vmul.f32 %v2936, 1.442695
        %v2985 = vpow.pop %v2984
        %v2986 = vmul.f32 %v2937, 1.442695
        %v2987 = vpow.pop %v2986
        %v2988 = vmul.f32 %v2938, 1.442695
        %v2989 = vpow.pop %v2988
        %v2990 = vmul.f32 %v2939, 1.442695
        %v2991 = vpow.pop %v2990
        %v2992 = vmul.f32 %v2940, 1.442695
        %v2993 = vpow.pop %v2992
        %v2994 = vmul.f32 %v2941, 1.442695
        %v2995 = vpow.pop %v2994
        %v2996 = vmul.f32 %v2942, 1.442695
        %v2997 = vpow.pop %v2996
        %v2998 = vmul.f32 %v2943, 1.442695
        %v2999 = vpow.pop %v2998
        %v3000 = vadd.f32 %v2945, 1.0
        %v3001 = vadd.f32 %v2947, 1.0
        %v3002 = vadd.f32 %v2949, 1.0
        %v3003 = vadd.f32 %v2951, 1.0
        %v3004 = vadd.f32 %v2953, 1.0
        %v3005 = vadd.f32 %v2955, 1.0
        %v3006 = vadd.f32 %v2957, 1.0
        %v3007 = vadd.f32 %v2959, 1.0
        %v3008 = vadd.f32 %v2961, 1.0
        %v3009 = vadd.f32 %v2963, 1.0
        %v3010 = vadd.f32 %v2965, 1.0
        %v3011 = vadd.f32 %v2967, 1.0
        %v3012 = vadd.f32 %v2969, 1.0
        %v3013 = vadd.f32 %v2971, 1.0
        %v3014 = vadd.f32 %v2973, 1.0
        %v3015 = vadd.f32 %v2975, 1.0
        %v3016 = vadd.f32 %v2977, 1.0
        %v3017 = vadd.f32 %v2979, 1.0
        %v3018 = vadd.f32 %v2981, 1.0
        %v3019 = vadd.f32 %v2983, 1.0
        %v3020 = vadd.f32 %v2985, 1.0
        %v3021 = vadd.f32 %v2987, 1.0
        %v3022 = vadd.f32 %v2989, 1.0
        %v3023 = vadd.f32 %v2991, 1.0
        %v3024 = vadd.f32 %v2993, 1.0
        %v3025 = vadd.f32 %v2995, 1.0
        %v3026 = vadd.f32 %v2997, 1.0
        %v3027 = vadd.f32 %v2999, 1.0
        %v3028 = vrcp.pop %v3000
        %v3029 = vrcp.pop %v3001
        %v3030 = vrcp.pop %v3002
        %v3031 = vrcp.pop %v3003
        %v3032 = vrcp.pop %v3004
        %v3033 = vrcp.pop %v3005
        %v3034 = vrcp.pop %v3006
        %v3035 = vrcp.pop %v3007
        %v3036 = vrcp.pop %v3008
        %v3037 = vrcp.pop %v3009
        %v3038 = vrcp.pop %v3010
        %v3039 = vrcp.pop %v3011
        %v3040 = vrcp.pop %v3012
        %v3041 = vrcp.pop %v3013
        %v3042 = vrcp.pop %v3014
        %v3043 = vrcp.pop %v3015
        %v3044 = vrcp.pop %v3016
        %v3045 = vrcp.pop %v3017
        %v3046 = vrcp.pop %v3018
        %v3047 = vrcp.pop %v3019
        %v3048 = vrcp.pop %v3020
        %v3049 = vrcp.pop %v3021
        %v3050 = vrcp.pop %v3022
        %v3051 = vrcp.pop %v3023
        %v3052 = vrcp.pop %v3024
        %v3053 = vrcp.pop %v3025
        %v3054 = vrcp.pop %v3026
        %v3055 = vrcp.pop %v3027
        %vm3056 = vcmp.ge.f32.partialorder %v2715, 0.0
        %vm3057 = vcmp.ge.f32.partialorder %v2717, 0.0
        %vm3058 = vcmp.ge.f32.partialorder %v2768, 0.0
        %vm3059 = vcmp.ge.f32.partialorder %v2770, 0.0
        %vm3060 = vcmp.ge.f32.partialorder %v2821, 0.0
        %vm3061 = vcmp.ge.f32.partialorder %v2823, 0.0
        %vm3062 = vcmp.ge.f32.partialorder %v2874, 0.0
        %vm3063 = vcmp.ge.f32.partialorder %v2719, 0.0
        %vm3064 = vcmp.ge.f32.partialorder %v2721, 0.0
        %vm3065 = vcmp.ge.f32.partialorder %v2772, 0.0
        %vm3066 = vcmp.ge.f32.partialorder %v2774, 0.0
        %vm3067 = vcmp.ge.f32.partialorder %v2825, 0.0
        %vm3068 = vcmp.ge.f32.partialorder %v2827, 0.0
        %vm3069 = vcmp.ge.f32.partialorder %v2877, 0.0
        %vm3070 = vcmp.ge.f32.partialorder %v2725, 0.0
        %vm3071 = vcmp.ge.f32.partialorder %v2727, 0.0
        %vm3072 = vcmp.ge.f32.partialorder %v2778, 0.0
        %vm3073 = vcmp.ge.f32.partialorder %v2780, 0.0
        %vm3074 = vcmp.ge.f32.partialorder %v2831, 0.0
        %vm3075 = vcmp.ge.f32.partialorder %v2833, 0.0
        %vm3076 = vcmp.ge.f32.partialorder %v2882, 0.0
        %vm3077 = vcmp.ge.f32.partialorder %v2729, 0.0
        %vm3078 = vcmp.ge.f32.partialorder %v2731, 0.0
        %vm3079 = vcmp.ge.f32.partialorder %v2782, 0.0
        %vm3080 = vcmp.ge.f32.partialorder %v2784, 0.0
        %vm3081 = vcmp.ge.f32.partialorder %v2835, 0.0
        %vm3082 = vcmp.ge.f32.partialorder %v2837, 0.0
        %vm3083 = vcmp.ge.f32.partialorder %v2885, 0.0
        %v3084 = vsub.f32 1.0, %v3028
        %v3085 = vsub.f32 1.0, %v3029
        %v3086 = vsub.f32 1.0, %v3030
        %v3087 = vsub.f32 1.0, %v3031
        %v3088 = vsub.f32 1.0, %v3032
        %v3089 = vsub.f32 1.0, %v3033
        %v3090 = vsub.f32 1.0, %v3034
        %v3091 = vsub.f32 1.0, %v3035
        %v3092 = vsub.f32 1.0, %v3036
        %v3093 = vsub.f32 1.0, %v3037
        %v3094 = vsub.f32 1.0, %v3038
        %v3095 = vsub.f32 1.0, %v3039
        %v3096 = vsub.f32 1.0, %v3040
        %v3097 = vsub.f32 1.0, %v3041
        %v3098 = vsub.f32 1.0, %v3042
        %v3099 = vsub.f32 1.0, %v3043
        %v3100 = vsub.f32 1.0, %v3044
        %v3101 = vsub.f32 1.0, %v3045
        %v3102 = vsub.f32 1.0, %v3046
        %v3103 = vsub.f32 1.0, %v3047
        %v3104 = vsub.f32 1.0, %v3048
        %v3105 = vsub.f32 1.0, %v3049
        %v3106 = vsub.f32 1.0, %v3050
        %v3107 = vsub.f32 1.0, %v3051
        %v3108 = vsub.f32 1.0, %v3052
        %v3109 = vsub.f32 1.0, %v3053
        %v3110 = vsub.f32 1.0, %v3054
        %v3111 = vsub.f32 1.0, %v3055
        %v3112 = vsel %vm3056, %v3028, %v3084
        %v3113 = vsel %vm3057, %v3029, %v3085
        %v3114 = vsel %vm3058, %v3030, %v3086
        %v3115 = vsel %vm3059, %v3031, %v3087
        %v3116 = vsel %vm3060, %v3032, %v3088
        %v3117 = vsel %vm3061, %v3033, %v3089
        %v3118 = vsel %vm3062, %v3034, %v3090
        %v3119 = vsel %vm3063, %v3035, %v3091
        %v3120 = vsel %vm3064, %v3036, %v3092
        %v3121 = vsel %vm3065, %v3037, %v3093
        %v3122 = vsel %vm3066, %v3038, %v3094
        %v3123 = vsel %vm3067, %v3039, %v3095
        %v3124 = vsel %vm3068, %v3040, %v3096
        %v3125 = vsel %vm3069, %v3041, %v3097
        %v3126 = vsel %vm3070, %v3042, %v3098
        %v3127 = vsel %vm3071, %v3043, %v3099
        %v3128 = vsel %vm3072, %v3044, %v3100
        %v3129 = vsel %vm3073, %v3045, %v3101
        %v3130 = vsel %vm3074, %v3046, %v3102
        %v3131 = vsel %vm3075, %v3047, %v3103
        %v3132 = vsel %vm3076, %v3048, %v3104
        %v3133 = vsel %vm3077, %v3049, %v3105
        %v3134 = vsel %vm3078, %v3050, %v3106
        %v3135 = vsel %vm3079, %v3051, %v3107
        %v3136 = vsel %vm3080, %v3052, %v3108
        %v3137 = vsel %vm3081, %v3053, %v3109
        %v3138 = vsel %vm3082, %v3054, %v3110
        %v3139 = vsel %vm3083, %v3055, %v3111
        %3140 = vst [vmem:[%s451] sm:$0xff] %v3112
        %3141 = vst [vmem:[%s451 + $0x8] sm:$0xff] %v3113
        %3142 = vst [vmem:[%s451 + $0x10] sm:$0xff] %v3114
        %3143 = vst [vmem:[%s451 + $0x18] sm:$0xff] %v3115
        %3144 = vst [vmem:[%s451 + $0x20] sm:$0xff] %v3116
        %3145 = vst [vmem:[%s451 + $0x28] sm:$0xff] %v3117
        %3146 = vst.msk [vmem:[%s451 + $0x30] sm:$0xff] %vm1118, %v3118
        %3147 = vst [vmem:[%s451 + $0x38] sm:$0xff] %v3119
        %3148 = vst [vmem:[%s451 + $0x40] sm:$0xff] %v3120
        %3149 = vst [vmem:[%s451 + $0x48] sm:$0xff] %v3121
        %3150 = vst [vmem:[%s451 + $0x50] sm:$0xff] %v3122
        %3151 = vst [vmem:[%s451 + $0x58] sm:$0xff] %v3123
        %3152 = vst [vmem:[%s451 + $0x60] sm:$0xff] %v3124
        %3153 = vst.msk [vmem:[%s451 + $0x68] sm:$0xff] %vm1118, %v3125
        %3154 = vst [vmem:[%s451 + $0x70] sm:$0xff] %v3126
        %3155 = vst [vmem:[%s451 + $0x78] sm:$0xff] %v3127
        %3156 = vst [vmem:[%s451 + $0x80] sm:$0xff] %v3128
        %3157 = vst [vmem:[%s451 + $0x88] sm:$0xff] %v3129
        %3158 = vst [vmem:[%s451 + $0x90] sm:$0xff] %v3130
        %3159 = vst [vmem:[%s451 + $0x98] sm:$0xff] %v3131
        %3160 = vst.msk [vmem:[%s451 + $0xa0] sm:$0xff] %vm1118, %v3132
        %3161 = vst [vmem:[%s451 + $0xa8] sm:$0xff] %v3133
        %3162 = vst [vmem:[%s451 + $0xb0] sm:$0xff] %v3134
        %3163 = vst [vmem:[%s451 + $0xb8] sm:$0xff] %v3135
        %3164 = vst [vmem:[%s451 + $0xc0] sm:$0xff] %v3136
        %3165 = vst [vmem:[%s451 + $0xc8] sm:$0xff] %v3137
        %3166 = vst [vmem:[%s451 + $0xd0] sm:$0xff] %v3138
        %3167 = vst.msk [vmem:[%s451 + $0xd8] sm:$0xff] %vm1118, %v3139
        %s3168 = sand.u32 %s313, 1
        %s3169 = scalar_lea.sflag [#allocation3], %s3168
        %s3170 = sand.u32 %s313, 1
        %s3171 = smul.addr %s3170, 224
        %s3172 = scalar_lea.vmem [#allocation2], %s3171
        // Predicated region
        $region73: #{denoising_ae_forward.1} parent=71 // pred_check
          %p3173 = pneg %p323
        $region74: #{denoising_ae_forward.1} parent=71 // pred_check_branch
          %3175 = sbr.rel (%p3173) target = $region76
        $region75: #{denoising_ae_forward.1} parent=71 // pred_region
          %s3176 = smul.u32 4, %s27
          %s3177 = ssub.s32 6, %s3176
          %p3178 = scmp.lt.s32.totalorder %s3177, 4
          %s3179 = scalar_select %p3178, %s3177, 4
          %s3180 = smul.u32 128, %s3179
          %s3181 = smul.u32 %s3180, 7
          %s3183 = ssub.s32 3584, %s3181
          %3184 = vsyncadd %s3169, %s3183
          %p3185 = scmp.ne.s32.totalorder 0, %s3181
          %s3186 = smul.addr %s3176, 7
          %s3187 = smul.addr %s3186, 128
          %s3188 = scalar_lea.hbm %s13, %s3187
          %s3189 = smul.u32 56, %s3179
          %s3190 = sshll.u32 %s3172, 4
          %s3191 = int_to_ptr.vmem [resolvable:$true] %s3190
          %s3192 = sshll.u32 %s3189, 4
          %3196 = dma.vmem_to_hbm [thread:$0]  (%p3185), %s3191, %s3192, %s3188, %s3169, 896, 896, 56
        $region76: #{denoising_ae_forward.1} parent=71 // pred_fallthru
          _
      $region72: #{denoising_ae_forward.1} parent=5 // pred_fallthru
        _
      %p3197 = scmp.le.s32.totalorder 2, %s22
      // Predicated region
      $region77: #{denoising_ae_forward.1} parent=5 // pred_check
        %p3198 = pneg %p3197
      $region78: #{denoising_ae_forward.1} parent=5 // pred_check_branch
        %3200 = sbr.rel (%p3198) target = $region80
      $region79: #{denoising_ae_forward.1} parent=5 // pred_region
        %s3201 = ssub.s32 %s22, 2
        // Predicated region
        $region81: #{denoising_ae_forward.1} parent=79 // pred_check
          %p3202 = pneg %p329
        $region82: #{denoising_ae_forward.1} parent=79 // pred_check_branch
          %3204 = sbr.rel (%p3202) target = $region84
        $region83: #{denoising_ae_forward.1} parent=79 // pred_region
          %s3205 = sand.u32 %s314, 1
          %s3206 = scalar_lea.sflag [#allocation3], %s3205
          %s3207 = sand.u32 %s314, 1
          %s3208 = smul.addr %s3207, 224
          %s3209 = scalar_lea.vmem [#allocation2], %s3208
          %3210 = dma.done %s3206, 3584
        $region84: #{denoising_ae_forward.1} parent=79 // pred_fallthru
          _
      $region80: #{denoising_ae_forward.1} parent=5 // pred_fallthru
        _
    $region6: #{denoising_ae_forward.1} parent=1 // loop_footer
      %s26 = sadd.s32 1, %s22
    $region7: #{denoising_ae_forward.1} parent=1 // loop_footer_branch
      %21 = sbr.rel target = $region3
    $region8: #{denoising_ae_forward.1} parent=1 // loop_exit
      _
    %3211 = vsyncpa [#allocation3], 1
    %s3212 = scalar_lea.sflag [#allocation3], 1
    %3213 = vsyncpa %s3212, 1

</llo_original>
